<compile_context>
chip_gen: v5e
topology: v5e:2x2
jax: 0.10.0
libtpu: 0.0.40
codegen_flags: <defaults>
</compile_context>

<pallas_src>
import functools

import jax
import jax.numpy as jnp
from jax.experimental import pallas as pl
from jax.experimental.pallas import tpu as pltpu

# ----------------------------- sizes (small) -------------------------------
B = 2          # batch
S = 8          # seq_length
E = 16         # word-embedding dim
H = 32         # num_hid
V_DIM = 32     # v_dim  (= channels of pre_pools['layer_L'])
HS = WS = 4    # spatial of pre_pools['layer_L']  -> K = HS*WS objects
K = HS * WS    # num_objs
A = 16         # number of answer classes
A_PAD = 128    # lane-dense padded classifier width (sliced to A in wrapper)
VOCAB = 50     # vocabulary size
LAYER = 3      # which pre_pools layer is consumed

_F32 = jnp.float32
_VMEM = pl.BlockSpec(memory_space=pltpu.MemorySpace.VMEM)


# ---------------------------------------------------------------------------
# Single fused kernel: GRU question encoder + attention + q/v nets + classifier
# ---------------------------------------------------------------------------
def base_model_kernel(wemb_ref, v_ref,
                      wx_ref, wh_ref, bx_ref, bh_ref,
                      wva_ref, bva_ref, wqa_ref, bqa_ref, wa_ref, ba_ref,
                      wq_ref, bq_ref, wv_ref, bv_ref,
                      w1_ref, b1_ref, w2_ref, b2_ref,
                      out_ref):
    # ---------------- GRU encoder (fused gates, hoisted input projection) ---
    # wemb_ref: [S*B, E] time-major (row t*B + b is token t of batch b).
    xw = (jnp.dot(wemb_ref[...], wx_ref[...], preferred_element_type=_F32)
          + bx_ref[...])                                    # [S*B, 3H]
    wh = wh_ref[...]                                        # [H, 3H]
    bh = bh_ref[...]                                        # [1, 3H]

    h = jnp.zeros((B, H), _F32)
    for t in range(S):                                      # static unroll, S=8
        xg = xw[t * B:(t + 1) * B, :]                       # [B, 3H] static slice
        hg = jnp.dot(h, wh, preferred_element_type=_F32) + bh
        r = jax.nn.sigmoid(xg[:, 0:H] + hg[:, 0:H])
        z = jax.nn.sigmoid(xg[:, H:2 * H] + hg[:, H:2 * H])
        n = jnp.tanh(xg[:, 2 * H:3 * H] + r * hg[:, 2 * H:3 * H])
        h = (1.0 - z) * n + z * h
    q_emb = h                                               # [B, H]

    # ---------------- attention (NewAttention) ------------------------------
    v = v_ref[...]                                          # [B, K, V]
    v_proj = jax.nn.relu(
        jnp.einsum('bkv,vh->bkh', v, wva_ref[...],
                   preferred_element_type=_F32) + bva_ref[...])       # [B, K, H]
    q_proj = jax.nn.relu(
        jnp.dot(q_emb, wqa_ref[...], preferred_element_type=_F32)
        + bqa_ref[...])                                                # [B, H]
    joint_att = v_proj * q_proj[:, None, :]                            # [B, K, H]

    # scores kept [B, K] with K on the lane axis (wa passed pre-transposed [1,H])
    s = jnp.sum(joint_att * wa_ref[...], axis=-1) + ba_ref[...]        # [B, K]
    s_max = jnp.max(s, axis=-1, keepdims=True)
    e = jnp.exp(s - s_max)
    att = e * pl.reciprocal(jnp.sum(e, axis=-1, keepdims=True), approx=True)

    # v_emb = (att * v_).sum over objects
    v_emb = jnp.sum(att[:, :, None] * v, axis=1)                       # [B, V]

    # ---------------- q_net / v_net (FCNet: Linear + ReLU) ------------------
    q_repr = jax.nn.relu(
        jnp.dot(q_emb, wq_ref[...], preferred_element_type=_F32) + bq_ref[...])
    v_repr = jax.nn.relu(
        jnp.dot(v_emb, wv_ref[...], preferred_element_type=_F32) + bv_ref[...])
    joint_repr = q_repr * v_repr                                       # [B, H]

    # ---------------- classifier: Linear -> ReLU -> Linear ------------------
    h1 = jax.nn.relu(
        jnp.dot(joint_repr, w1_ref[...], preferred_element_type=_F32)
        + b1_ref[...])
    # w2/b2 are zero-padded to A_PAD=128 lanes -> lane-dense (unmasked) store.
    out_ref[...] = (
        jnp.dot(h1, w2_ref[...], preferred_element_type=_F32) + b2_ref[...])


def fused_forward_call(w_emb_flat, v_bkv, gru_params, head_params):
    args = (w_emb_flat, v_bkv) + tuple(gru_params) + tuple(head_params)
    return pl.pallas_call(
        base_model_kernel,
        out_shape=jax.ShapeDtypeStruct((B, A_PAD), _F32),
        in_specs=[_VMEM] * len(args),
        out_specs=_VMEM,
    )(*args)


# ---------------------------------------------------------------------------
# Parameter construction (deterministic, synthetic).
# ---------------------------------------------------------------------------
def make_params(seed=42):
    base_key = jax.random.PRNGKey(seed)
    counter = [0]

    def w(shape, scale=0.1):
        k = jax.random.fold_in(base_key, counter[0])
        counter[0] += 1
        return (scale * jax.random.normal(k, shape)).astype(_F32)

    emb_table = w((VOCAB, E), 0.1)

    # Fused GRU gates: columns ordered [r | z | n].
    gru = (
        w((E, 3 * H)),      # Wx  = [Wxr | Wxz | Wxn]
        w((H, 3 * H)),      # Wh  = [Whr | Whz | Whn]
        w((1, 3 * H)),      # bx  = [bxr | bxz | bxn]
        w((1, 3 * H)),      # bh  = [bhr | bhz | bhn]
    )

    # classifier layer 2, zero-padded to A_PAD lanes for a lane-dense store.
    w2 = jnp.zeros((2 * H, A_PAD), _F32).at[:, :A].set(w((2 * H, A)))
    b2 = jnp.zeros((1, A_PAD), _F32).at[:, :A].set(w((1, A)))

    head = (
        w((V_DIM, H)), w((1, H)),      # attention v_proj
        w((H, H)), w((1, H)),          # attention q_proj
        w((1, H)), w((1, 1)),          # attention linear (pre-transposed row), bias
        w((H, H)), w((1, H)),          # q_net
        w((V_DIM, H)), w((1, H)),      # v_net
        w((H, 2 * H)), w((1, 2 * H)),  # classifier layer 1
        w2, b2,                        # classifier layer 2 (padded)
    )
    return emb_table, gru, head


# ---------------------------------------------------------------------------
# Full forward (glue in plain JAX, hot path in one fused Pallas kernel).
# ---------------------------------------------------------------------------
@jax.jit
def base_model_forward(emb_table, gru_params, head_params, pre_pools_layer, q_tokens):
    # v_ = v.view(B, C, -1).permute(0, 2, 1)
    v_ = pre_pools_layer.reshape(B, V_DIM, HS * WS).transpose(0, 2, 1)   # [B, K, V]
    v_ = v_.astype(_F32)

    # w_emb(q): embedding lookup (gather) — glue in XLA.
    w_emb = jnp.take(emb_table, q_tokens, axis=0)                        # [B, S, E]
    # time-major flatten so the GRU input projection is one big matmul.
    w_emb_flat = jnp.transpose(w_emb, (1, 0, 2)).reshape(S * B, E)       # [S*B, E]

    logits_pad = fused_forward_call(w_emb_flat, v_, gru_params, head_params)
    logits = logits_pad[:, :A]                                           # [B, A]
    # TODO(synk): g = self.G.decode(self.d(joint_repr.view(bs,-1,1,1)), pre_pools)
    # is skipped: UNetWithResnet50Encoder / Bridge_128 are external, undefined here.
    return logits


if __name__ == "__main__":
    emb_table, gru_params, head_params = make_params(seed=42)

    key = jax.random.PRNGKey(0)
    k_q, k_v, k_m = jax.random.split(key, 3)
    q_tokens = jax.random.randint(k_q, (B, S), 0, VOCAB, dtype=jnp.int32)
    # pre_pools['layer_3'] features, NCHW like PyTorch.
    pre_pools_layer3 = jax.random.normal(k_v, (B, V_DIM, HS, WS), dtype=_F32)
    # 'id' and image 'm' are unused when finetune=False; built for shape parity only.
    image_m = jax.random.normal(k_m, (B, 3, 16, 16), dtype=_F32)
    del image_m

    logits = base_model_forward(
        emb_table, gru_params, head_params, pre_pools_layer3, q_tokens)
    logits = jax.block_until_ready(logits)
    assert logits.shape == (B, A) and logits.dtype == jnp.float32
    print("KERNEL_OK")
</pallas_src>

<mosaic_0001>
module attributes {stable_mosaic.version = 11 : i64} {
  func.func @base_model_kernel(%arg0: memref<16x16xf32, #tpu.memory_space<vmem>>, %arg1: memref<2x16x32xf32, #tpu.memory_space<vmem>>, %arg2: memref<16x96xf32, #tpu.memory_space<vmem>>, %arg3: memref<32x96xf32, #tpu.memory_space<vmem>>, %arg4: memref<1x96xf32, #tpu.memory_space<vmem>>, %arg5: memref<1x96xf32, #tpu.memory_space<vmem>>, %arg6: memref<32x32xf32, #tpu.memory_space<vmem>>, %arg7: memref<1x32xf32, #tpu.memory_space<vmem>>, %arg8: memref<32x32xf32, #tpu.memory_space<vmem>>, %arg9: memref<1x32xf32, #tpu.memory_space<vmem>>, %arg10: memref<1x32xf32, #tpu.memory_space<vmem>>, %arg11: memref<1x1xf32, #tpu.memory_space<vmem>>, %arg12: memref<32x32xf32, #tpu.memory_space<vmem>>, %arg13: memref<1x32xf32, #tpu.memory_space<vmem>>, %arg14: memref<32x32xf32, #tpu.memory_space<vmem>>, %arg15: memref<1x32xf32, #tpu.memory_space<vmem>>, %arg16: memref<32x64xf32, #tpu.memory_space<vmem>>, %arg17: memref<1x64xf32, #tpu.memory_space<vmem>>, %arg18: memref<64x128xf32, #tpu.memory_space<vmem>>, %arg19: memref<1x128xf32, #tpu.memory_space<vmem>>, %arg20: memref<2x128xf32, #tpu.memory_space<vmem>>) attributes {dimension_semantics = [], scalar_prefetch = 0 : i64, scratch_operands = 0 : i64, tpu.core_type = #tpu.core_type<tc>} {
    %c0 = arith.constant 0 : index
    %c0_0 = arith.constant 0 : index
    %0 = vector.load %arg0[%c0, %c0_0] : memref<16x16xf32, #tpu.memory_space<vmem>>, vector<16x16xf32>
    %c0_1 = arith.constant 0 : index
    %c0_2 = arith.constant 0 : index
    %1 = vector.load %arg2[%c0_1, %c0_2] : memref<16x96xf32, #tpu.memory_space<vmem>>, vector<16x96xf32>
    %cst = arith.constant dense<0.000000e+00> : vector<16x96xf32>
    %2 = tpu.matmul %0, %1, %cst {dimension_numbers = #tpu.dot_dimension_numbers<[1], [0], [0], [1], [0, 0, 1, 1], [], []>} : vector<16x16xf32>, vector<16x96xf32>, vector<16x96xf32> -> vector<16x96xf32>
    %c0_3 = arith.constant 0 : index
    %c0_4 = arith.constant 0 : index
    %3 = vector.load %arg4[%c0_3, %c0_4] : memref<1x96xf32, #tpu.memory_space<vmem>>, vector<1x96xf32>
    %4 = vector.broadcast %3 : vector<1x96xf32> to vector<16x96xf32>
    %5 = arith.addf %2, %4 : vector<16x96xf32>
    %c0_5 = arith.constant 0 : index
    %c0_6 = arith.constant 0 : index
    %6 = vector.load %arg3[%c0_5, %c0_6] : memref<32x96xf32, #tpu.memory_space<vmem>>, vector<32x96xf32>
    %c0_7 = arith.constant 0 : index
    %c0_8 = arith.constant 0 : index
    %7 = vector.load %arg5[%c0_7, %c0_8] : memref<1x96xf32, #tpu.memory_space<vmem>>, vector<1x96xf32>
    %cst_9 = arith.constant 0.000000e+00 : f32
    %8 = vector.broadcast %cst_9 : f32 to vector<2x32xf32>
    %9 = vector.extract_strided_slice %5 {offsets = [0, 0], sizes = [2, 96], strides = [1, 1]} : vector<16x96xf32> to vector<2x96xf32>
    %cst_10 = arith.constant dense<0.000000e+00> : vector<2x96xf32>
    %10 = tpu.matmul %8, %6, %cst_10 {dimension_numbers = #tpu.dot_dimension_numbers<[1], [0], [0], [1], [0, 0, 1, 1], [], []>} : vector<2x32xf32>, vector<32x96xf32>, vector<2x96xf32> -> vector<2x96xf32>
    %11 = vector.broadcast %7 : vector<1x96xf32> to vector<2x96xf32>
    %12 = arith.addf %10, %11 : vector<2x96xf32>
    %13 = vector.extract_strided_slice %9 {offsets = [0, 0], sizes = [2, 32], strides = [1, 1]} : vector<2x96xf32> to vector<2x32xf32>
    %14 = vector.extract_strided_slice %12 {offsets = [0, 0], sizes = [2, 32], strides = [1, 1]} : vector<2x96xf32> to vector<2x32xf32>
    %15 = arith.addf %13, %14 : vector<2x32xf32>
    %16 = arith.negf %15 : vector<2x32xf32>
    %17 = math.exp %16 : vector<2x32xf32>
    %cst_11 = arith.constant 1.000000e+00 : f32
    %18 = vector.broadcast %cst_11 : f32 to vector<2x32xf32>
    %19 = arith.addf %18, %17 : vector<2x32xf32>
    %20 = arith.divf %18, %19 : vector<2x32xf32>
    %21 = vector.extract_strided_slice %9 {offsets = [0, 32], sizes = [2, 32], strides = [1, 1]} : vector<2x96xf32> to vector<2x32xf32>
    %22 = vector.extract_strided_slice %12 {offsets = [0, 32], sizes = [2, 32], strides = [1, 1]} : vector<2x96xf32> to vector<2x32xf32>
    %23 = arith.addf %21, %22 : vector<2x32xf32>
    %24 = arith.negf %23 : vector<2x32xf32>
    %25 = math.exp %24 : vector<2x32xf32>
    %cst_12 = arith.constant 1.000000e+00 : f32
    %26 = vector.broadcast %cst_12 : f32 to vector<2x32xf32>
    %27 = arith.addf %26, %25 : vector<2x32xf32>
    %28 = arith.divf %26, %27 : vector<2x32xf32>
    %29 = vector.extract_strided_slice %9 {offsets = [0, 64], sizes = [2, 32], strides = [1, 1]} : vector<2x96xf32> to vector<2x32xf32>
    %30 = vector.extract_strided_slice %12 {offsets = [0, 64], sizes = [2, 32], strides = [1, 1]} : vector<2x96xf32> to vector<2x32xf32>
    %31 = arith.mulf %20, %30 : vector<2x32xf32>
    %32 = arith.addf %29, %31 : vector<2x32xf32>
    %33 = math.tanh %32 : vector<2x32xf32>
    %cst_13 = arith.constant 1.000000e+00 : f32
    %34 = vector.broadcast %cst_13 : f32 to vector<2x32xf32>
    %35 = arith.subf %34, %28 : vector<2x32xf32>
    %36 = arith.mulf %35, %33 : vector<2x32xf32>
    %37 = arith.mulf %28, %8 : vector<2x32xf32>
    %38 = arith.addf %36, %37 : vector<2x32xf32>
    %39 = vector.extract_strided_slice %5 {offsets = [2, 0], sizes = [2, 96], strides = [1, 1]} : vector<16x96xf32> to vector<2x96xf32>
    %cst_14 = arith.constant dense<0.000000e+00> : vector<2x96xf32>
    %40 = tpu.matmul %38, %6, %cst_14 {dimension_numbers = #tpu.dot_dimension_numbers<[1], [0], [0], [1], [0, 0, 1, 1], [], []>} : vector<2x32xf32>, vector<32x96xf32>, vector<2x96xf32> -> vector<2x96xf32>
    %41 = vector.broadcast %7 : vector<1x96xf32> to vector<2x96xf32>
    %42 = arith.addf %40, %41 : vector<2x96xf32>
    %43 = vector.extract_strided_slice %39 {offsets = [0, 0], sizes = [2, 32], strides = [1, 1]} : vector<2x96xf32> to vector<2x32xf32>
    %44 = vector.extract_strided_slice %42 {offsets = [0, 0], sizes = [2, 32], strides = [1, 1]} : vector<2x96xf32> to vector<2x32xf32>
    %45 = arith.addf %43, %44 : vector<2x32xf32>
    %46 = arith.negf %45 : vector<2x32xf32>
    %47 = math.exp %46 : vector<2x32xf32>
    %cst_15 = arith.constant 1.000000e+00 : f32
    %48 = vector.broadcast %cst_15 : f32 to vector<2x32xf32>
    %49 = arith.addf %48, %47 : vector<2x32xf32>
    %50 = arith.divf %48, %49 : vector<2x32xf32>
    %51 = vector.extract_strided_slice %39 {offsets = [0, 32], sizes = [2, 32], strides = [1, 1]} : vector<2x96xf32> to vector<2x32xf32>
    %52 = vector.extract_strided_slice %42 {offsets = [0, 32], sizes = [2, 32], strides = [1, 1]} : vector<2x96xf32> to vector<2x32xf32>
    %53 = arith.addf %51, %52 : vector<2x32xf32>
    %54 = arith.negf %53 : vector<2x32xf32>
    %55 = math.exp %54 : vector<2x32xf32>
    %cst_16 = arith.constant 1.000000e+00 : f32
    %56 = vector.broadcast %cst_16 : f32 to vector<2x32xf32>
    %57 = arith.addf %56, %55 : vector<2x32xf32>
    %58 = arith.divf %56, %57 : vector<2x32xf32>
    %59 = vector.extract_strided_slice %39 {offsets = [0, 64], sizes = [2, 32], strides = [1, 1]} : vector<2x96xf32> to vector<2x32xf32>
    %60 = vector.extract_strided_slice %42 {offsets = [0, 64], sizes = [2, 32], strides = [1, 1]} : vector<2x96xf32> to vector<2x32xf32>
    %61 = arith.mulf %50, %60 : vector<2x32xf32>
    %62 = arith.addf %59, %61 : vector<2x32xf32>
    %63 = math.tanh %62 : vector<2x32xf32>
    %cst_17 = arith.constant 1.000000e+00 : f32
    %64 = vector.broadcast %cst_17 : f32 to vector<2x32xf32>
    %65 = arith.subf %64, %58 : vector<2x32xf32>
    %66 = arith.mulf %65, %63 : vector<2x32xf32>
    %67 = arith.mulf %58, %38 : vector<2x32xf32>
    %68 = arith.addf %66, %67 : vector<2x32xf32>
    %69 = vector.extract_strided_slice %5 {offsets = [4, 0], sizes = [2, 96], strides = [1, 1]} : vector<16x96xf32> to vector<2x96xf32>
    %cst_18 = arith.constant dense<0.000000e+00> : vector<2x96xf32>
    %70 = tpu.matmul %68, %6, %cst_18 {dimension_numbers = #tpu.dot_dimension_numbers<[1], [0], [0], [1], [0, 0, 1, 1], [], []>} : vector<2x32xf32>, vector<32x96xf32>, vector<2x96xf32> -> vector<2x96xf32>
    %71 = vector.broadcast %7 : vector<1x96xf32> to vector<2x96xf32>
    %72 = arith.addf %70, %71 : vector<2x96xf32>
    %73 = vector.extract_strided_slice %69 {offsets = [0, 0], sizes = [2, 32], strides = [1, 1]} : vector<2x96xf32> to vector<2x32xf32>
    %74 = vector.extract_strided_slice %72 {offsets = [0, 0], sizes = [2, 32], strides = [1, 1]} : vector<2x96xf32> to vector<2x32xf32>
    %75 = arith.addf %73, %74 : vector<2x32xf32>
    %76 = arith.negf %75 : vector<2x32xf32>
    %77 = math.exp %76 : vector<2x32xf32>
    %cst_19 = arith.constant 1.000000e+00 : f32
    %78 = vector.broadcast %cst_19 : f32 to vector<2x32xf32>
    %79 = arith.addf %78, %77 : vector<2x32xf32>
    %80 = arith.divf %78, %79 : vector<2x32xf32>
    %81 = vector.extract_strided_slice %69 {offsets = [0, 32], sizes = [2, 32], strides = [1, 1]} : vector<2x96xf32> to vector<2x32xf32>
    %82 = vector.extract_strided_slice %72 {offsets = [0, 32], sizes = [2, 32], strides = [1, 1]} : vector<2x96xf32> to vector<2x32xf32>
    %83 = arith.addf %81, %82 : vector<2x32xf32>
    %84 = arith.negf %83 : vector<2x32xf32>
    %85 = math.exp %84 : vector<2x32xf32>
    %cst_20 = arith.constant 1.000000e+00 : f32
    %86 = vector.broadcast %cst_20 : f32 to vector<2x32xf32>
    %87 = arith.addf %86, %85 : vector<2x32xf32>
    %88 = arith.divf %86, %87 : vector<2x32xf32>
    %89 = vector.extract_strided_slice %69 {offsets = [0, 64], sizes = [2, 32], strides = [1, 1]} : vector<2x96xf32> to vector<2x32xf32>
    %90 = vector.extract_strided_slice %72 {offsets = [0, 64], sizes = [2, 32], strides = [1, 1]} : vector<2x96xf32> to vector<2x32xf32>
    %91 = arith.mulf %80, %90 : vector<2x32xf32>
    %92 = arith.addf %89, %91 : vector<2x32xf32>
    %93 = math.tanh %92 : vector<2x32xf32>
    %cst_21 = arith.constant 1.000000e+00 : f32
    %94 = vector.broadcast %cst_21 : f32 to vector<2x32xf32>
    %95 = arith.subf %94, %88 : vector<2x32xf32>
    %96 = arith.mulf %95, %93 : vector<2x32xf32>
    %97 = arith.mulf %88, %68 : vector<2x32xf32>
    %98 = arith.addf %96, %97 : vector<2x32xf32>
    %99 = vector.extract_strided_slice %5 {offsets = [6, 0], sizes = [2, 96], strides = [1, 1]} : vector<16x96xf32> to vector<2x96xf32>
    %cst_22 = arith.constant dense<0.000000e+00> : vector<2x96xf32>
    %100 = tpu.matmul %98, %6, %cst_22 {dimension_numbers = #tpu.dot_dimension_numbers<[1], [0], [0], [1], [0, 0, 1, 1], [], []>} : vector<2x32xf32>, vector<32x96xf32>, vector<2x96xf32> -> vector<2x96xf32>
    %101 = vector.broadcast %7 : vector<1x96xf32> to vector<2x96xf32>
    %102 = arith.addf %100, %101 : vector<2x96xf32>
    %103 = vector.extract_strided_slice %99 {offsets = [0, 0], sizes = [2, 32], strides = [1, 1]} : vector<2x96xf32> to vector<2x32xf32>
    %104 = vector.extract_strided_slice %102 {offsets = [0, 0], sizes = [2, 32], strides = [1, 1]} : vector<2x96xf32> to vector<2x32xf32>
    %105 = arith.addf %103, %104 : vector<2x32xf32>
    %106 = arith.negf %105 : vector<2x32xf32>
    %107 = math.exp %106 : vector<2x32xf32>
    %cst_23 = arith.constant 1.000000e+00 : f32
    %108 = vector.broadcast %cst_23 : f32 to vector<2x32xf32>
    %109 = arith.addf %108, %107 : vector<2x32xf32>
    %110 = arith.divf %108, %109 : vector<2x32xf32>
    %111 = vector.extract_strided_slice %99 {offsets = [0, 32], sizes = [2, 32], strides = [1, 1]} : vector<2x96xf32> to vector<2x32xf32>
    %112 = vector.extract_strided_slice %102 {offsets = [0, 32], sizes = [2, 32], strides = [1, 1]} : vector<2x96xf32> to vector<2x32xf32>
    %113 = arith.addf %111, %112 : vector<2x32xf32>
    %114 = arith.negf %113 : vector<2x32xf32>
    %115 = math.exp %114 : vector<2x32xf32>
    %cst_24 = arith.constant 1.000000e+00 : f32
    %116 = vector.broadcast %cst_24 : f32 to vector<2x32xf32>
    %117 = arith.addf %116, %115 : vector<2x32xf32>
    %118 = arith.divf %116, %117 : vector<2x32xf32>
    %119 = vector.extract_strided_slice %99 {offsets = [0, 64], sizes = [2, 32], strides = [1, 1]} : vector<2x96xf32> to vector<2x32xf32>
    %120 = vector.extract_strided_slice %102 {offsets = [0, 64], sizes = [2, 32], strides = [1, 1]} : vector<2x96xf32> to vector<2x32xf32>
    %121 = arith.mulf %110, %120 : vector<2x32xf32>
    %122 = arith.addf %119, %121 : vector<2x32xf32>
    %123 = math.tanh %122 : vector<2x32xf32>
    %cst_25 = arith.constant 1.000000e+00 : f32
    %124 = vector.broadcast %cst_25 : f32 to vector<2x32xf32>
    %125 = arith.subf %124, %118 : vector<2x32xf32>
    %126 = arith.mulf %125, %123 : vector<2x32xf32>
    %127 = arith.mulf %118, %98 : vector<2x32xf32>
    %128 = arith.addf %126, %127 : vector<2x32xf32>
    %129 = vector.extract_strided_slice %5 {offsets = [8, 0], sizes = [2, 96], strides = [1, 1]} : vector<16x96xf32> to vector<2x96xf32>
    %cst_26 = arith.constant dense<0.000000e+00> : vector<2x96xf32>
    %130 = tpu.matmul %128, %6, %cst_26 {dimension_numbers = #tpu.dot_dimension_numbers<[1], [0], [0], [1], [0, 0, 1, 1], [], []>} : vector<2x32xf32>, vector<32x96xf32>, vector<2x96xf32> -> vector<2x96xf32>
    %131 = vector.broadcast %7 : vector<1x96xf32> to vector<2x96xf32>
    %132 = arith.addf %130, %131 : vector<2x96xf32>
    %133 = vector.extract_strided_slice %129 {offsets = [0, 0], sizes = [2, 32], strides = [1, 1]} : vector<2x96xf32> to vector<2x32xf32>
    %134 = vector.extract_strided_slice %132 {offsets = [0, 0], sizes = [2, 32], strides = [1, 1]} : vector<2x96xf32> to vector<2x32xf32>
    %135 = arith.addf %133, %134 : vector<2x32xf32>
    %136 = arith.negf %135 : vector<2x32xf32>
    %137 = math.exp %136 : vector<2x32xf32>
    %cst_27 = arith.constant 1.000000e+00 : f32
    %138 = vector.broadcast %cst_27 : f32 to vector<2x32xf32>
    %139 = arith.addf %138, %137 : vector<2x32xf32>
    %140 = arith.divf %138, %139 : vector<2x32xf32>
    %141 = vector.extract_strided_slice %129 {offsets = [0, 32], sizes = [2, 32], strides = [1, 1]} : vector<2x96xf32> to vector<2x32xf32>
    %142 = vector.extract_strided_slice %132 {offsets = [0, 32], sizes = [2, 32], strides = [1, 1]} : vector<2x96xf32> to vector<2x32xf32>
    %143 = arith.addf %141, %142 : vector<2x32xf32>
    %144 = arith.negf %143 : vector<2x32xf32>
    %145 = math.exp %144 : vector<2x32xf32>
    %cst_28 = arith.constant 1.000000e+00 : f32
    %146 = vector.broadcast %cst_28 : f32 to vector<2x32xf32>
    %147 = arith.addf %146, %145 : vector<2x32xf32>
    %148 = arith.divf %146, %147 : vector<2x32xf32>
    %149 = vector.extract_strided_slice %129 {offsets = [0, 64], sizes = [2, 32], strides = [1, 1]} : vector<2x96xf32> to vector<2x32xf32>
    %150 = vector.extract_strided_slice %132 {offsets = [0, 64], sizes = [2, 32], strides = [1, 1]} : vector<2x96xf32> to vector<2x32xf32>
    %151 = arith.mulf %140, %150 : vector<2x32xf32>
    %152 = arith.addf %149, %151 : vector<2x32xf32>
    %153 = math.tanh %152 : vector<2x32xf32>
    %cst_29 = arith.constant 1.000000e+00 : f32
    %154 = vector.broadcast %cst_29 : f32 to vector<2x32xf32>
    %155 = arith.subf %154, %148 : vector<2x32xf32>
    %156 = arith.mulf %155, %153 : vector<2x32xf32>
    %157 = arith.mulf %148, %128 : vector<2x32xf32>
    %158 = arith.addf %156, %157 : vector<2x32xf32>
    %159 = vector.extract_strided_slice %5 {offsets = [10, 0], sizes = [2, 96], strides = [1, 1]} : vector<16x96xf32> to vector<2x96xf32>
    %cst_30 = arith.constant dense<0.000000e+00> : vector<2x96xf32>
    %160 = tpu.matmul %158, %6, %cst_30 {dimension_numbers = #tpu.dot_dimension_numbers<[1], [0], [0], [1], [0, 0, 1, 1], [], []>} : vector<2x32xf32>, vector<32x96xf32>, vector<2x96xf32> -> vector<2x96xf32>
    %161 = vector.broadcast %7 : vector<1x96xf32> to vector<2x96xf32>
    %162 = arith.addf %160, %161 : vector<2x96xf32>
    %163 = vector.extract_strided_slice %159 {offsets = [0, 0], sizes = [2, 32], strides = [1, 1]} : vector<2x96xf32> to vector<2x32xf32>
    %164 = vector.extract_strided_slice %162 {offsets = [0, 0], sizes = [2, 32], strides = [1, 1]} : vector<2x96xf32> to vector<2x32xf32>
    %165 = arith.addf %163, %164 : vector<2x32xf32>
    %166 = arith.negf %165 : vector<2x32xf32>
    %167 = math.exp %166 : vector<2x32xf32>
    %cst_31 = arith.constant 1.000000e+00 : f32
    %168 = vector.broadcast %cst_31 : f32 to vector<2x32xf32>
    %169 = arith.addf %168, %167 : vector<2x32xf32>
    %170 = arith.divf %168, %169 : vector<2x32xf32>
    %171 = vector.extract_strided_slice %159 {offsets = [0, 32], sizes = [2, 32], strides = [1, 1]} : vector<2x96xf32> to vector<2x32xf32>
    %172 = vector.extract_strided_slice %162 {offsets = [0, 32], sizes = [2, 32], strides = [1, 1]} : vector<2x96xf32> to vector<2x32xf32>
    %173 = arith.addf %171, %172 : vector<2x32xf32>
    %174 = arith.negf %173 : vector<2x32xf32>
    %175 = math.exp %174 : vector<2x32xf32>
    %cst_32 = arith.constant 1.000000e+00 : f32
    %176 = vector.broadcast %cst_32 : f32 to vector<2x32xf32>
    %177 = arith.addf %176, %175 : vector<2x32xf32>
    %178 = arith.divf %176, %177 : vector<2x32xf32>
    %179 = vector.extract_strided_slice %159 {offsets = [0, 64], sizes = [2, 32], strides = [1, 1]} : vector<2x96xf32> to vector<2x32xf32>
    %180 = vector.extract_strided_slice %162 {offsets = [0, 64], sizes = [2, 32], strides = [1, 1]} : vector<2x96xf32> to vector<2x32xf32>
    %181 = arith.mulf %170, %180 : vector<2x32xf32>
    %182 = arith.addf %179, %181 : vector<2x32xf32>
    %183 = math.tanh %182 : vector<2x32xf32>
    %cst_33 = arith.constant 1.000000e+00 : f32
    %184 = vector.broadcast %cst_33 : f32 to vector<2x32xf32>
    %185 = arith.subf %184, %178 : vector<2x32xf32>
    %186 = arith.mulf %185, %183 : vector<2x32xf32>
    %187 = arith.mulf %178, %158 : vector<2x32xf32>
    %188 = arith.addf %186, %187 : vector<2x32xf32>
    %189 = vector.extract_strided_slice %5 {offsets = [12, 0], sizes = [2, 96], strides = [1, 1]} : vector<16x96xf32> to vector<2x96xf32>
    %cst_34 = arith.constant dense<0.000000e+00> : vector<2x96xf32>
    %190 = tpu.matmul %188, %6, %cst_34 {dimension_numbers = #tpu.dot_dimension_numbers<[1], [0], [0], [1], [0, 0, 1, 1], [], []>} : vector<2x32xf32>, vector<32x96xf32>, vector<2x96xf32> -> vector<2x96xf32>
    %191 = vector.broadcast %7 : vector<1x96xf32> to vector<2x96xf32>
    %192 = arith.addf %190, %191 : vector<2x96xf32>
    %193 = vector.extract_strided_slice %189 {offsets = [0, 0], sizes = [2, 32], strides = [1, 1]} : vector<2x96xf32> to vector<2x32xf32>
    %194 = vector.extract_strided_slice %192 {offsets = [0, 0], sizes = [2, 32], strides = [1, 1]} : vector<2x96xf32> to vector<2x32xf32>
    %195 = arith.addf %193, %194 : vector<2x32xf32>
    %196 = arith.negf %195 : vector<2x32xf32>
    %197 = math.exp %196 : vector<2x32xf32>
    %cst_35 = arith.constant 1.000000e+00 : f32
    %198 = vector.broadcast %cst_35 : f32 to vector<2x32xf32>
    %199 = arith.addf %198, %197 : vector<2x32xf32>
    %200 = arith.divf %198, %199 : vector<2x32xf32>
    %201 = vector.extract_strided_slice %189 {offsets = [0, 32], sizes = [2, 32], strides = [1, 1]} : vector<2x96xf32> to vector<2x32xf32>
    %202 = vector.extract_strided_slice %192 {offsets = [0, 32], sizes = [2, 32], strides = [1, 1]} : vector<2x96xf32> to vector<2x32xf32>
    %203 = arith.addf %201, %202 : vector<2x32xf32>
    %204 = arith.negf %203 : vector<2x32xf32>
    %205 = math.exp %204 : vector<2x32xf32>
    %cst_36 = arith.constant 1.000000e+00 : f32
    %206 = vector.broadcast %cst_36 : f32 to vector<2x32xf32>
    %207 = arith.addf %206, %205 : vector<2x32xf32>
    %208 = arith.divf %206, %207 : vector<2x32xf32>
    %209 = vector.extract_strided_slice %189 {offsets = [0, 64], sizes = [2, 32], strides = [1, 1]} : vector<2x96xf32> to vector<2x32xf32>
    %210 = vector.extract_strided_slice %192 {offsets = [0, 64], sizes = [2, 32], strides = [1, 1]} : vector<2x96xf32> to vector<2x32xf32>
    %211 = arith.mulf %200, %210 : vector<2x32xf32>
    %212 = arith.addf %209, %211 : vector<2x32xf32>
    %213 = math.tanh %212 : vector<2x32xf32>
    %cst_37 = arith.constant 1.000000e+00 : f32
    %214 = vector.broadcast %cst_37 : f32 to vector<2x32xf32>
    %215 = arith.subf %214, %208 : vector<2x32xf32>
    %216 = arith.mulf %215, %213 : vector<2x32xf32>
    %217 = arith.mulf %208, %188 : vector<2x32xf32>
    %218 = arith.addf %216, %217 : vector<2x32xf32>
    %219 = vector.extract_strided_slice %5 {offsets = [14, 0], sizes = [2, 96], strides = [1, 1]} : vector<16x96xf32> to vector<2x96xf32>
    %cst_38 = arith.constant dense<0.000000e+00> : vector<2x96xf32>
    %220 = tpu.matmul %218, %6, %cst_38 {dimension_numbers = #tpu.dot_dimension_numbers<[1], [0], [0], [1], [0, 0, 1, 1], [], []>} : vector<2x32xf32>, vector<32x96xf32>, vector<2x96xf32> -> vector<2x96xf32>
    %221 = vector.broadcast %7 : vector<1x96xf32> to vector<2x96xf32>
    %222 = arith.addf %220, %221 : vector<2x96xf32>
    %223 = vector.extract_strided_slice %219 {offsets = [0, 0], sizes = [2, 32], strides = [1, 1]} : vector<2x96xf32> to vector<2x32xf32>
    %224 = vector.extract_strided_slice %222 {offsets = [0, 0], sizes = [2, 32], strides = [1, 1]} : vector<2x96xf32> to vector<2x32xf32>
    %225 = arith.addf %223, %224 : vector<2x32xf32>
    %226 = arith.negf %225 : vector<2x32xf32>
    %227 = math.exp %226 : vector<2x32xf32>
    %cst_39 = arith.constant 1.000000e+00 : f32
    %228 = vector.broadcast %cst_39 : f32 to vector<2x32xf32>
    %229 = arith.addf %228, %227 : vector<2x32xf32>
    %230 = arith.divf %228, %229 : vector<2x32xf32>
    %231 = vector.extract_strided_slice %219 {offsets = [0, 32], sizes = [2, 32], strides = [1, 1]} : vector<2x96xf32> to vector<2x32xf32>
    %232 = vector.extract_strided_slice %222 {offsets = [0, 32], sizes = [2, 32], strides = [1, 1]} : vector<2x96xf32> to vector<2x32xf32>
    %233 = arith.addf %231, %232 : vector<2x32xf32>
    %234 = arith.negf %233 : vector<2x32xf32>
    %235 = math.exp %234 : vector<2x32xf32>
    %cst_40 = arith.constant 1.000000e+00 : f32
    %236 = vector.broadcast %cst_40 : f32 to vector<2x32xf32>
    %237 = arith.addf %236, %235 : vector<2x32xf32>
    %238 = arith.divf %236, %237 : vector<2x32xf32>
    %239 = vector.extract_strided_slice %219 {offsets = [0, 64], sizes = [2, 32], strides = [1, 1]} : vector<2x96xf32> to vector<2x32xf32>
    %240 = vector.extract_strided_slice %222 {offsets = [0, 64], sizes = [2, 32], strides = [1, 1]} : vector<2x96xf32> to vector<2x32xf32>
    %241 = arith.mulf %230, %240 : vector<2x32xf32>
    %242 = arith.addf %239, %241 : vector<2x32xf32>
    %243 = math.tanh %242 : vector<2x32xf32>
    %cst_41 = arith.constant 1.000000e+00 : f32
    %244 = vector.broadcast %cst_41 : f32 to vector<2x32xf32>
    %245 = arith.subf %244, %238 : vector<2x32xf32>
    %246 = arith.mulf %245, %243 : vector<2x32xf32>
    %247 = arith.mulf %238, %218 : vector<2x32xf32>
    %248 = arith.addf %246, %247 : vector<2x32xf32>
    %c0_42 = arith.constant 0 : index
    %c0_43 = arith.constant 0 : index
    %c0_44 = arith.constant 0 : index
    %249 = vector.load %arg1[%c0_42, %c0_43, %c0_44] : memref<2x16x32xf32, #tpu.memory_space<vmem>>, vector<2x16x32xf32>
    %c0_45 = arith.constant 0 : index
    %c0_46 = arith.constant 0 : index
    %250 = vector.load %arg6[%c0_45, %c0_46] : memref<32x32xf32, #tpu.memory_space<vmem>>, vector<32x32xf32>
    "tpu.trace_start"() <{level = 10 : i32, message = "bkv,vh->bkh"}> : () -> ()
    %cst_47 = arith.constant dense<0.000000e+00> : vector<2x16x32xf32>
    %251 = tpu.matmul %249, %250, %cst_47 {dimension_numbers = #tpu.dot_dimension_numbers<[2], [0], [0, 1], [1], [0, 0, 0, 1, 1, 1], [], []>} : vector<2x16x32xf32>, vector<32x32xf32>, vector<2x16x32xf32> -> vector<2x16x32xf32>
    "tpu.trace_stop"() : () -> ()
    %c0_48 = arith.constant 0 : index
    %c0_49 = arith.constant 0 : index
    %252 = vector.load %arg7[%c0_48, %c0_49] : memref<1x32xf32, #tpu.memory_space<vmem>>, vector<1x32xf32>
    %253 = vector.shape_cast %252 : vector<1x32xf32> to vector<1x1x32xf32>
    %254 = vector.broadcast %253 : vector<1x1x32xf32> to vector<2x16x32xf32>
    %255 = arith.addf %251, %254 : vector<2x16x32xf32>
    %cst_50 = arith.constant 0.000000e+00 : f32
    %256 = vector.broadcast %cst_50 : f32 to vector<2x16x32xf32>
    %257 = arith.maximumf %255, %256 : vector<2x16x32xf32>
    %c0_51 = arith.constant 0 : index
    %c0_52 = arith.constant 0 : index
    %258 = vector.load %arg8[%c0_51, %c0_52] : memref<32x32xf32, #tpu.memory_space<vmem>>, vector<32x32xf32>
    %cst_53 = arith.constant dense<0.000000e+00> : vector<2x32xf32>
    %259 = tpu.matmul %248, %258, %cst_53 {dimension_numbers = #tpu.dot_dimension_numbers<[1], [0], [0], [1], [0, 0, 1, 1], [], []>} : vector<2x32xf32>, vector<32x32xf32>, vector<2x32xf32> -> vector<2x32xf32>
    %c0_54 = arith.constant 0 : index
    %c0_55 = arith.constant 0 : index
    %260 = vector.load %arg9[%c0_54, %c0_55] : memref<1x32xf32, #tpu.memory_space<vmem>>, vector<1x32xf32>
    %261 = vector.broadcast %260 : vector<1x32xf32> to vector<2x32xf32>
    %262 = arith.addf %259, %261 : vector<2x32xf32>
    %cst_56 = arith.constant 0.000000e+00 : f32
    %263 = vector.broadcast %cst_56 : f32 to vector<2x32xf32>
    %264 = arith.maximumf %262, %263 : vector<2x32xf32>
    %265 = vector.shape_cast %264 : vector<2x32xf32> to vector<2x1x32xf32>
    %266 = vector.broadcast %265 : vector<2x1x32xf32> to vector<2x16x32xf32>
    %267 = arith.mulf %257, %266 : vector<2x16x32xf32>
    %c0_57 = arith.constant 0 : index
    %c0_58 = arith.constant 0 : index
    %268 = vector.load %arg10[%c0_57, %c0_58] : memref<1x32xf32, #tpu.memory_space<vmem>>, vector<1x32xf32>
    %269 = vector.shape_cast %268 : vector<1x32xf32> to vector<1x1x32xf32>
    %270 = vector.broadcast %269 : vector<1x1x32xf32> to vector<2x16x32xf32>
    %271 = arith.mulf %267, %270 : vector<2x16x32xf32>
    %cst_59 = arith.constant dense<0.000000e+00> : vector<2x16xf32>
    %272 = vector.multi_reduction <add>, %271, %cst_59 [2] : vector<2x16x32xf32> to vector<2x16xf32>
    %c0_60 = arith.constant 0 : index
    %c0_61 = arith.constant 0 : index
    %273 = vector.load %arg11[%c0_60, %c0_61] : memref<1x1xf32, #tpu.memory_space<vmem>>, vector<1x1xf32>
    %274 = vector.broadcast %273 : vector<1x1xf32> to vector<2x16xf32>
    %275 = arith.addf %272, %274 : vector<2x16xf32>
    %cst_62 = arith.constant dense<0xFF800000> : vector<2xf32>
    %276 = vector.multi_reduction <maximumf>, %275, %cst_62 [1] : vector<2x16xf32> to vector<2xf32>
    %277 = vector.shape_cast %276 : vector<2xf32> to vector<2x1xf32>
    %278 = vector.broadcast %277 : vector<2x1xf32> to vector<2x16xf32>
    %279 = arith.subf %275, %278 : vector<2x16xf32>
    %280 = math.exp %279 : vector<2x16xf32>
    %cst_63 = arith.constant dense<0.000000e+00> : vector<2xf32>
    %281 = vector.multi_reduction <add>, %280, %cst_63 [1] : vector<2x16xf32> to vector<2xf32>
    %282 = vector.shape_cast %281 : vector<2xf32> to vector<2x1xf32>
    %283 = tpu.reciprocal %282 {approx = true} : vector<2x1xf32> -> vector<2x1xf32>
    %284 = vector.broadcast %283 : vector<2x1xf32> to vector<2x16xf32>
    %285 = arith.mulf %280, %284 : vector<2x16xf32>
    %286 = vector.shape_cast %285 : vector<2x16xf32> to vector<2x16x1xf32>
    %287 = vector.broadcast %286 : vector<2x16x1xf32> to vector<2x16x32xf32>
    %288 = arith.mulf %287, %249 : vector<2x16x32xf32>
    %cst_64 = arith.constant dense<0.000000e+00> : vector<2x32xf32>
    %289 = vector.multi_reduction <add>, %288, %cst_64 [1] : vector<2x16x32xf32> to vector<2x32xf32>
    %c0_65 = arith.constant 0 : index
    %c0_66 = arith.constant 0 : index
    %290 = vector.load %arg12[%c0_65, %c0_66] : memref<32x32xf32, #tpu.memory_space<vmem>>, vector<32x32xf32>
    %cst_67 = arith.constant dense<0.000000e+00> : vector<2x32xf32>
    %291 = tpu.matmul %248, %290, %cst_67 {dimension_numbers = #tpu.dot_dimension_numbers<[1], [0], [0], [1], [0, 0, 1, 1], [], []>} : vector<2x32xf32>, vector<32x32xf32>, vector<2x32xf32> -> vector<2x32xf32>
    %c0_68 = arith.constant 0 : index
    %c0_69 = arith.constant 0 : index
    %292 = vector.load %arg13[%c0_68, %c0_69] : memref<1x32xf32, #tpu.memory_space<vmem>>, vector<1x32xf32>
    %293 = vector.broadcast %292 : vector<1x32xf32> to vector<2x32xf32>
    %294 = arith.addf %291, %293 : vector<2x32xf32>
    %cst_70 = arith.constant 0.000000e+00 : f32
    %295 = vector.broadcast %cst_70 : f32 to vector<2x32xf32>
    %296 = arith.maximumf %294, %295 : vector<2x32xf32>
    %c0_71 = arith.constant 0 : index
    %c0_72 = arith.constant 0 : index
    %297 = vector.load %arg14[%c0_71, %c0_72] : memref<32x32xf32, #tpu.memory_space<vmem>>, vector<32x32xf32>
    %cst_73 = arith.constant dense<0.000000e+00> : vector<2x32xf32>
    %298 = tpu.matmul %289, %297, %cst_73 {dimension_numbers = #tpu.dot_dimension_numbers<[1], [0], [0], [1], [0, 0, 1, 1], [], []>} : vector<2x32xf32>, vector<32x32xf32>, vector<2x32xf32> -> vector<2x32xf32>
    %c0_74 = arith.constant 0 : index
    %c0_75 = arith.constant 0 : index
    %299 = vector.load %arg15[%c0_74, %c0_75] : memref<1x32xf32, #tpu.memory_space<vmem>>, vector<1x32xf32>
    %300 = vector.broadcast %299 : vector<1x32xf32> to vector<2x32xf32>
    %301 = arith.addf %298, %300 : vector<2x32xf32>
    %cst_76 = arith.constant 0.000000e+00 : f32
    %302 = vector.broadcast %cst_76 : f32 to vector<2x32xf32>
    %303 = arith.maximumf %301, %302 : vector<2x32xf32>
    %304 = arith.mulf %296, %303 : vector<2x32xf32>
    %c0_77 = arith.constant 0 : index
    %c0_78 = arith.constant 0 : index
    %305 = vector.load %arg16[%c0_77, %c0_78] : memref<32x64xf32, #tpu.memory_space<vmem>>, vector<32x64xf32>
    %cst_79 = arith.constant dense<0.000000e+00> : vector<2x64xf32>
    %306 = tpu.matmul %304, %305, %cst_79 {dimension_numbers = #tpu.dot_dimension_numbers<[1], [0], [0], [1], [0, 0, 1, 1], [], []>} : vector<2x32xf32>, vector<32x64xf32>, vector<2x64xf32> -> vector<2x64xf32>
    %c0_80 = arith.constant 0 : index
    %c0_81 = arith.constant 0 : index
    %307 = vector.load %arg17[%c0_80, %c0_81] : memref<1x64xf32, #tpu.memory_space<vmem>>, vector<1x64xf32>
    %308 = vector.broadcast %307 : vector<1x64xf32> to vector<2x64xf32>
    %309 = arith.addf %306, %308 : vector<2x64xf32>
    %cst_82 = arith.constant 0.000000e+00 : f32
    %310 = vector.broadcast %cst_82 : f32 to vector<2x64xf32>
    %311 = arith.maximumf %309, %310 : vector<2x64xf32>
    %c0_83 = arith.constant 0 : index
    %c0_84 = arith.constant 0 : index
    %312 = vector.load %arg18[%c0_83, %c0_84] : memref<64x128xf32, #tpu.memory_space<vmem>>, vector<64x128xf32>
    %cst_85 = arith.constant dense<0.000000e+00> : vector<2x128xf32>
    %313 = tpu.matmul %311, %312, %cst_85 {dimension_numbers = #tpu.dot_dimension_numbers<[1], [0], [0], [1], [0, 0, 1, 1], [], []>} : vector<2x64xf32>, vector<64x128xf32>, vector<2x128xf32> -> vector<2x128xf32>
    %c0_86 = arith.constant 0 : index
    %c0_87 = arith.constant 0 : index
    %314 = vector.load %arg19[%c0_86, %c0_87] : memref<1x128xf32, #tpu.memory_space<vmem>>, vector<1x128xf32>
    %315 = vector.broadcast %314 : vector<1x128xf32> to vector<2x128xf32>
    %316 = arith.addf %313, %315 : vector<2x128xf32>
    %c0_88 = arith.constant 0 : index
    %c0_89 = arith.constant 0 : index
    %317 = vector.load %arg20[%c0_88, %c0_89] : memref<2x128xf32, #tpu.memory_space<vmem>>, vector<2x128xf32>
    tpu.vector_store %arg20[%c0_88, %c0_89], %316 {strides = array<i32>} : memref<2x128xf32, #tpu.memory_space<vmem>>, vector<2x128xf32>,
    return
  }
}

</mosaic_0001>

<llo_original>
// kernel: base_model_forward.1
$region0: #{base_model_forward.1}
  #allocation0 [shape = 'u32[]', space=smem, size = 0x4, offset = 0x4, fixed_abs, tag = 'smem constant byte address 0x4 - core index']
  #allocation1 [shape = 'u32[72,128]{1,0:T(1,128)}', space=vmem, size = 0x9000, scoped, tag = 'internal scratch']
  #allocation2 [shape = 'f32[1,1]{1,0:T(1,128)S(1)}', space=vmem, size = 0x200, scoped, tag = 'scoped memory for base_model_forward.1']
  %s0 = inlined_call_operand.vmem [shape: f32[16,16], index: 0, kind: input, shape index: {}]
  %s1 = inlined_call_operand.vmem [shape: f32[2,16,32], index: 1, kind: input, shape index: {}]
  %s2 = inlined_call_operand.vmem [shape: f32[16,96], index: 2, kind: input, shape index: {}]
  %s3 = inlined_call_operand.vmem [shape: f32[32,96], index: 3, kind: input, shape index: {}]
  %s4 = inlined_call_operand.vmem [shape: f32[1,96], index: 4, kind: input, shape index: {}]
  %s5 = inlined_call_operand.vmem [shape: f32[1,96], index: 5, kind: input, shape index: {}]
  %s6 = inlined_call_operand.vmem [shape: f32[32,32], index: 6, kind: input, shape index: {}]
  %s7 = inlined_call_operand.vmem [shape: f32[1,32], index: 7, kind: input, shape index: {}]
  %s8 = inlined_call_operand.vmem [shape: f32[32,32], index: 8, kind: input, shape index: {}]
  %s9 = inlined_call_operand.vmem [shape: f32[1,32], index: 9, kind: input, shape index: {}]
  %s10 = inlined_call_operand.vmem [shape: f32[1,32], index: 10, kind: input, shape index: {}]
  %s11 = inlined_call_operand.<no memory space> [shape: f32[1,1], index: 11, kind: input, shape index: {}]
  %s12 = inlined_call_operand.vmem [shape: f32[32,32], index: 12, kind: input, shape index: {}]
  %s13 = inlined_call_operand.hbm [shape: f32[1,32], index: 13, kind: input, shape index: {}]
  %s14 = inlined_call_operand.vmem [shape: f32[32,32], index: 14, kind: input, shape index: {}]
  %s15 = inlined_call_operand.hbm [shape: f32[1,32], index: 15, kind: input, shape index: {}]
  %s16 = inlined_call_operand.hbm [shape: f32[32,64], index: 16, kind: input, shape index: {}]
  %s17 = inlined_call_operand.vmem [shape: f32[1,64], index: 17, kind: input, shape index: {}]
  %s18 = inlined_call_operand.vmem [shape: f32[64,128], index: 18, kind: input, shape index: {}]
  %s19 = inlined_call_operand.vmem [shape: f32[1,128], index: 19, kind: input, shape index: {}]
  %s20 = inlined_call_operand.hbm [shape: f32[2,128], index: 20, kind: output, shape index: {}]
  %s21 = sld [smem:[#allocation0]]
  $region102: #{base_model_forward.1} parent=0
    _
  %s23 = ssub.s32 1, %s21
  %s24 = scalar_select 0, %s23, %s21
  %v25 = vstv %s11
  %26 = vst [vmem:[#allocation2] sm:$0x1] %v25
  $region1: #{base_model_forward.1} parent=0
    #allocation3 [shape = 'u8[512]{0}', space=vmem, size = 0x400, scoped, tag = 'input window, operand 13, single buffered']
    #allocation4 [shape = 's32[1]{0}', space=sflag, size = 0x4, scoped, tag = 'scoped memory for base_model_forward.1']
    #allocation5 [shape = 's32[1]{0}', space=sflag, size = 0x4, scoped, tag = 'scoped memory for base_model_forward.1']
    #allocation6 [shape = 'u8[512]{0}', space=vmem, size = 0x400, scoped, tag = 'input window, operand 15, single buffered']
    #allocation7 [shape = 's32[1]{0}', space=sflag, size = 0x4, scoped, tag = 'scoped memory for base_model_forward.1']
    #allocation8 [shape = 'u8[16384]{0}', space=vmem, size = 0x4000, scoped, tag = 'input window, operand 16, single buffered']
    #allocation9 [shape = 'u8[1024]{0}', space=vmem, size = 0x400, scoped, tag = 'output window, operand 0, single buffered']
    %27 = vsyncpa [#allocation4], 0
    %28 = vsyncpa [#allocation7], 0
    %29 = vsyncpa [#allocation5], 0
    // Predicated region
    $region2: #{base_model_forward.1} parent=1 // pred_check
      _
    $region3: #{base_model_forward.1} parent=1 // pred_check_branch
      %31 = sbr.rel (0) target = $region5
    $region4: #{base_model_forward.1} parent=1 // pred_region
      _
    $region5: #{base_model_forward.1} parent=1 // pred_fallthru
      _
    // Predicated region
    $region6: #{base_model_forward.1} parent=1 // pred_check
      _
    $region7: #{base_model_forward.1} parent=1 // pred_check_branch
      %33 = sbr.rel (0) target = $region9
    $region8: #{base_model_forward.1} parent=1 // pred_region
      _
    $region9: #{base_model_forward.1} parent=1 // pred_fallthru
      _
    // Predicated region
    $region10: #{base_model_forward.1} parent=1 // pred_check
      _
    $region11: #{base_model_forward.1} parent=1 // pred_check_branch
      %35 = sbr.rel (0) target = $region13
    $region12: #{base_model_forward.1} parent=1 // pred_region
      _
    $region13: #{base_model_forward.1} parent=1 // pred_fallthru
      _
    // Predicated region
    $region14: #{base_model_forward.1} parent=1 // pred_check
      _
    $region15: #{base_model_forward.1} parent=1 // pred_check_branch
      %37 = sbr.rel (0) target = $region17
    $region16: #{base_model_forward.1} parent=1 // pred_region
      _
    $region17: #{base_model_forward.1} parent=1 // pred_fallthru
      _
    // Predicated region
    $region18: #{base_model_forward.1} parent=1 // pred_check
      _
    $region19: #{base_model_forward.1} parent=1 // pred_check_branch
      %39 = sbr.rel (0) target = $region21
    $region20: #{base_model_forward.1} parent=1 // pred_region
      _
    $region21: #{base_model_forward.1} parent=1 // pred_fallthru
      _
    // Predicated region
    $region22: #{base_model_forward.1} parent=1 // pred_check
      _
    $region23: #{base_model_forward.1} parent=1 // pred_check_branch
      %41 = sbr.rel (0) target = $region25
    $region24: #{base_model_forward.1} parent=1 // pred_region
      _
    $region25: #{base_model_forward.1} parent=1 // pred_fallthru
      _
    // Predicated region
    $region26: #{base_model_forward.1} parent=1 // pred_check
      _
    $region27: #{base_model_forward.1} parent=1 // pred_check_branch
      %43 = sbr.rel (0) target = $region29
    $region28: #{base_model_forward.1} parent=1 // pred_region
      _
    $region29: #{base_model_forward.1} parent=1 // pred_fallthru
      _
    // Predicated region
    $region30: #{base_model_forward.1} parent=1 // pred_check
      _
    $region31: #{base_model_forward.1} parent=1 // pred_check_branch
      %45 = sbr.rel (0) target = $region33
    $region32: #{base_model_forward.1} parent=1 // pred_region
      _
    $region33: #{base_model_forward.1} parent=1 // pred_fallthru
      _
    // Predicated region
    $region34: #{base_model_forward.1} parent=1 // pred_check
      _
    $region35: #{base_model_forward.1} parent=1 // pred_check_branch
      %47 = sbr.rel (0) target = $region37
    $region36: #{base_model_forward.1} parent=1 // pred_region
      _
    $region37: #{base_model_forward.1} parent=1 // pred_fallthru
      _
    // Predicated region
    $region38: #{base_model_forward.1} parent=1 // pred_check
      _
    $region39: #{base_model_forward.1} parent=1 // pred_check_branch
      %49 = sbr.rel (0) target = $region41
    $region40: #{base_model_forward.1} parent=1 // pred_region
      _
    $region41: #{base_model_forward.1} parent=1 // pred_fallthru
      _
    // Predicated region
    $region42: #{base_model_forward.1} parent=1 // pred_check
      _
    $region43: #{base_model_forward.1} parent=1 // pred_check_branch
      %51 = sbr.rel (0) target = $region45
    $region44: #{base_model_forward.1} parent=1 // pred_region
      _
    $region45: #{base_model_forward.1} parent=1 // pred_fallthru
      _
    // Predicated region
    $region46: #{base_model_forward.1} parent=1 // pred_check
      _
    $region47: #{base_model_forward.1} parent=1 // pred_check_branch
      %53 = sbr.rel (0) target = $region49
    $region48: #{base_model_forward.1} parent=1 // pred_region
      _
    $region49: #{base_model_forward.1} parent=1 // pred_fallthru
      _
    // Predicated region
    $region50: #{base_model_forward.1} parent=1 // pred_check
      _
    $region51: #{base_model_forward.1} parent=1 // pred_check_branch
      %55 = sbr.rel (0) target = $region53
    $region52: #{base_model_forward.1} parent=1 // pred_region
      _
    $region53: #{base_model_forward.1} parent=1 // pred_fallthru
      _
    // Predicated region
    $region54: #{base_model_forward.1} parent=1 // pred_check
      _
    $region55: #{base_model_forward.1} parent=1 // pred_check_branch
      %57 = sbr.rel (0) target = $region57
    $region56: #{base_model_forward.1} parent=1 // pred_region
      %59 = vsyncadd [#allocation4], 0
      %s61 = sshll.u32 %s13, 4
      %s62 = int_to_ptr.hbm [resolvable:$true] %s61
      %s63 = sshll.u32 [#allocation3], 4
      %s64 = int_to_ptr.vmem [resolvable:$true] %s63
      %66 = dma.hbm_to_vmem [thread:$0]  %s62, 16, %s64, [#allocation4]
    $region57: #{base_model_forward.1} parent=1 // pred_fallthru
      _
    // Predicated region
    $region58: #{base_model_forward.1} parent=1 // pred_check
      _
    $region59: #{base_model_forward.1} parent=1 // pred_check_branch
      %68 = sbr.rel (0) target = $region61
    $region60: #{base_model_forward.1} parent=1 // pred_region
      _
    $region61: #{base_model_forward.1} parent=1 // pred_fallthru
      _
    // Predicated region
    $region62: #{base_model_forward.1} parent=1 // pred_check
      _
    $region63: #{base_model_forward.1} parent=1 // pred_check_branch
      %70 = sbr.rel (0) target = $region65
    $region64: #{base_model_forward.1} parent=1 // pred_region
      %72 = vsyncadd [#allocation7], 0
      %s74 = sshll.u32 %s15, 4
      %s75 = int_to_ptr.hbm [resolvable:$true] %s74
      %s76 = sshll.u32 [#allocation6], 4
      %s77 = int_to_ptr.vmem [resolvable:$true] %s76
      %79 = dma.hbm_to_vmem [thread:$0]  %s75, 16, %s77, [#allocation7]
    $region65: #{base_model_forward.1} parent=1 // pred_fallthru
      _
    // Predicated region
    $region66: #{base_model_forward.1} parent=1 // pred_check
      _
    $region67: #{base_model_forward.1} parent=1 // pred_check_branch
      %81 = sbr.rel (0) target = $region69
    $region68: #{base_model_forward.1} parent=1 // pred_region
      %83 = vsyncadd [#allocation7], 0
      %s84 = sshll.u32 %s16, 4
      %s85 = int_to_ptr.hbm [resolvable:$true] %s84
      %s86 = sshll.u32 [#allocation8], 4
      %s87 = int_to_ptr.vmem [resolvable:$true] %s86
      %92 = dma.hbm_to_vmem [thread:$0]  %s85, 512, %s87, [#allocation7], 128, 128, 8
    $region69: #{base_model_forward.1} parent=1 // pred_fallthru
      _
    // Predicated region
    $region70: #{base_model_forward.1} parent=1 // pred_check
      _
    $region71: #{base_model_forward.1} parent=1 // pred_check_branch
      %94 = sbr.rel (0) target = $region73
    $region72: #{base_model_forward.1} parent=1 // pred_region
      _
    $region73: #{base_model_forward.1} parent=1 // pred_fallthru
      _
    // Predicated region
    $region74: #{base_model_forward.1} parent=1 // pred_check
      _
    $region75: #{base_model_forward.1} parent=1 // pred_check_branch
      %96 = sbr.rel (0) target = $region77
    $region76: #{base_model_forward.1} parent=1 // pred_region
      _
    $region77: #{base_model_forward.1} parent=1 // pred_fallthru
      _
    // Predicated region
    $region78: #{base_model_forward.1} parent=1 // pred_check
      _
    $region79: #{base_model_forward.1} parent=1 // pred_check_branch
      %98 = sbr.rel (0) target = $region81
    $region80: #{base_model_forward.1} parent=1 // pred_region
      _
    $region81: #{base_model_forward.1} parent=1 // pred_fallthru
      _
    // Predicated region
    $region82: #{base_model_forward.1} parent=1 // pred_check
      _
    $region83: #{base_model_forward.1} parent=1 // pred_check_branch
      %100 = sbr.rel (0) target = $region85
    $region84: #{base_model_forward.1} parent=1 // pred_region
      %102 = dma.done [#allocation4], 16
    $region85: #{base_model_forward.1} parent=1 // pred_fallthru
      _
    // Predicated region
    $region86: #{base_model_forward.1} parent=1 // pred_check
      _
    $region87: #{base_model_forward.1} parent=1 // pred_check_branch
      %104 = sbr.rel (0) target = $region89
    $region88: #{base_model_forward.1} parent=1 // pred_region
      %106 = dma.done [#allocation7], 16
    $region89: #{base_model_forward.1} parent=1 // pred_fallthru
      _
    // Predicated region
    $region90: #{base_model_forward.1} parent=1 // pred_check
      _
    $region91: #{base_model_forward.1} parent=1 // pred_check_branch
      %108 = sbr.rel (0) target = $region93
    $region92: #{base_model_forward.1} parent=1 // pred_region
      %110 = dma.done [#allocation7], 512
    $region93: #{base_model_forward.1} parent=1 // pred_fallthru
      _
    %v111 = vld [vmem:[%s0] sm:$0xff]
    %v112 = vld [vmem:[%s0 + $0x8] sm:$0xff]
    %v113 = vld [vmem:[%s2] sm:$0xff]
    %v114 = vld [vmem:[%s2 + $0x8] sm:$0xff]
    %v115 = vld [vmem:[%s4] sm:$0x1]
    %v117 = vperm.slane %v115, 0
    %vm119 = vcmask 130048
    %v121 = vsel %vm119, %v111, 0
    %v124 = vsel %vm119, %v112, 0
    %126 = vmatpush.msra.mxu0 0.0
    %127 = vmatpush.msra.mxu0 0.0
    %128 = vmatpush.msra.mxu0 0.0
    %129 = vmatpush.msra.mxu0 0.0
    %130 = vmatpush.msra.mxu0 0.0
    %131 = vmatpush.msra.mxu0 0.0
    %132 = vmatpush.msra.mxu0 0.0
    %133 = vmatpush.msra.mxu0 0.0
    %134 = vmatpush.msra.mxu0 0.0
    %135 = vmatpush.msra.mxu0 0.0
    %136 = vmatpush.msra.mxu0 0.0
    %137 = vmatpush.msra.mxu0 0.0
    %138 = vmatpush.msra.mxu0 0.0
    %139 = vmatpush.msra.mxu0 0.0
    %140 = vmatpush.msra.mxu0 %v114
    %141 = vmatpush.msra.mxu0 %v113
    %142 = vmatmul.f32.gmra.mxu0 %v121
    %v143 = vpop.f32.mrf.mxu0
    %v144 = vadd.f32 %v117, %v143
    %145 = vmatmul.f32.gmra.mxu0 %v124
    %v146 = vpop.f32.mrf.mxu0
    %v147 = vadd.f32 %v117, %v146
    %148 = vdwg.mxu0
    %v149 = vld [vmem:[%s3] sm:$0xff]
    %v150 = vld [vmem:[%s3 + $0x8] sm:$0xff]
    %v151 = vld [vmem:[%s3 + $0x10] sm:$0xff]
    %v152 = vld [vmem:[%s3 + $0x18] sm:$0xff]
    %v153 = vld [vmem:[%s5] sm:$0x1]
    %v155 = vperm.slane %v153, 0
    %vm157 = vcmask 261120
    %v159 = vsel %vm157, 0.0, 0
    %161 = vmatpush.msra.mxu0 0.0
    %162 = vmatpush.msra.mxu0 0.0
    %163 = vmatpush.msra.mxu0 0.0
    %164 = vmatpush.msra.mxu0 0.0
    %165 = vmatpush.msra.mxu0 0.0
    %166 = vmatpush.msra.mxu0 0.0
    %167 = vmatpush.msra.mxu0 0.0
    %168 = vmatpush.msra.mxu0 0.0
    %169 = vmatpush.msra.mxu0 0.0
    %170 = vmatpush.msra.mxu0 0.0
    %171 = vmatpush.msra.mxu0 0.0
    %172 = vmatpush.msra.mxu0 0.0
    %173 = vmatpush.msra.mxu0 %v152
    %174 = vmatpush.msra.mxu0 %v151
    %175 = vmatpush.msra.mxu0 %v150
    %176 = vmatpush.msra.mxu0 %v149
    %177 = vmatmul.f32.gmra.mxu0 %v159
    %v178 = vpop.f32.mrf.mxu0
    %v179 = vadd.f32 %v155, %v178
    %180 = vdwg.mxu0
    %v181 = vadd.f32 %v144, %v179
    %v182 = vxor.u32 %v181, 2147483648
    %v183 = vmul.f32 %v182, 1.442695
    %v184 = vpow.pop %v183
    %v185 = vadd.f32 %v184, 1.0
    %v186 = vrcp.pop %v185
    %v187 = vmul.f32 %v185, %v186
    %v188 = vsub.f32 1.0, %v187
    %v189 = vmul.f32 %v186, %v188
    %v190 = vadd.f32 %v186, %v189
    %vm191 = vweird.f32 %v185
    %vm192 = vweird.f32 %v186
    %vm193 = vmor %vm191, %vm192
    %v194 = vsel %vm193, %v186, %v190
    %v195 = vand.u32 2147483647, %v185
    %vm196 = vcmp.eq.f32.partialorder %v195, 8.507059e+37
    %v197 = vand.u32 %v185, 2147483648
    %v198 = vor.u32 1.1754944e-38, %v197
    %v199 = vsel %vm196, %v198, %v194
    %v200 = vmul.f32 1.0, %v199
    %202 = vrot.lane.b32.xlu0 %v179, 64
    %v203 = vpop.permute.xlu0 %202
    %v205 = vmul.f32 %v200, %v203
    %207 = vrot.lane.b32.xlu0 %v205, 64
    %v208 = vpop.permute.xlu0 %207
    %v210 = vadd.f32 %v144, %v208
    %v211 = vtanh.pop %v210
    %v212 = vsub.f32 1.0, %v200
    %214 = vrot.lane.b32.xlu0 %v211, 96
    %v215 = vpop.permute.xlu0 %214
    %v217 = vmul.f32 %v212, %v215
    %v218 = vmul.f32 %v200, 0.0
    %v219 = vadd.f32 %v217, %v218
    %221 = vrot.lane.b32.xlu0 %v219, 96
    %v222 = vpop.permute.xlu0 %221
    %v223 = vsel %vm157, %v222, 0
    %225 = vmatpush.msra.mxu0 0.0
    %226 = vmatpush.msra.mxu0 0.0
    %227 = vmatpush.msra.mxu0 0.0
    %228 = vmatpush.msra.mxu0 0.0
    %229 = vmatpush.msra.mxu0 0.0
    %230 = vmatpush.msra.mxu0 0.0
    %231 = vmatpush.msra.mxu0 0.0
    %232 = vmatpush.msra.mxu0 0.0
    %233 = vmatpush.msra.mxu0 0.0
    %234 = vmatpush.msra.mxu0 0.0
    %235 = vmatpush.msra.mxu0 0.0
    %236 = vmatpush.msra.mxu0 0.0
    %237 = vmatpush.msra.mxu0 %v152
    %238 = vmatpush.msra.mxu0 %v151
    %239 = vmatpush.msra.mxu0 %v150
    %240 = vmatpush.msra.mxu0 %v149
    %241 = vmatmul.f32.gmra.mxu0 %v223
    %v242 = vpop.f32.mrf.mxu0
    %v243 = vadd.f32 %v155, %v242
    %244 = vdwg.mxu0
    %v246 = vrot.slane %v243, 6
    %v248 = vadd.f32 %v144, %v246
    %v249 = vxor.u32 %v248, 2147483648
    %v250 = vmul.f32 %v249, 1.442695
    %v251 = vpow.pop %v250
    %v252 = vadd.f32 %v251, 1.0
    %v253 = vrcp.pop %v252
    %v254 = vmul.f32 %v252, %v253
    %v255 = vsub.f32 1.0, %v254
    %v256 = vmul.f32 %v253, %v255
    %v257 = vadd.f32 %v253, %v256
    %vm258 = vweird.f32 %v252
    %vm259 = vweird.f32 %v253
    %vm260 = vmor %vm258, %vm259
    %v261 = vsel %vm260, %v253, %v257
    %v262 = vand.u32 2147483647, %v252
    %vm263 = vcmp.eq.f32.partialorder %v262, 8.507059e+37
    %v264 = vand.u32 %v252, 2147483648
    %v265 = vor.u32 1.1754944e-38, %v264
    %v266 = vsel %vm263, %v265, %v261
    %v267 = vmul.f32 1.0, %v266
    %268 = vrot.lane.b32.xlu0 %v246, 64
    %v269 = vpop.permute.xlu0 %268
    %v271 = vmul.f32 %v267, %v269
    %273 = vrot.lane.b32.xlu0 %v271, 64
    %v274 = vpop.permute.xlu0 %273
    %v276 = vadd.f32 %v144, %v274
    %v277 = vtanh.pop %v276
    %v278 = vsub.f32 1.0, %v267
    %280 = vrot.lane.b32.xlu0 %v277, 96
    %v281 = vpop.permute.xlu0 %280
    %v283 = vmul.f32 %v278, %v281
    %v284 = vrot.slane %v219, 6
    %v286 = vmul.f32 %v267, %v284
    %v287 = vadd.f32 %v283, %v286
    %v289 = vrot.slane %v287, 2
    %290 = vrot.lane.b32.xlu0 %v289, 96
    %v291 = vpop.permute.xlu0 %290
    %v292 = vsel %vm157, %v291, 0
    %294 = vmatpush.msra.mxu0 0.0
    %295 = vmatpush.msra.mxu0 0.0
    %296 = vmatpush.msra.mxu0 0.0
    %297 = vmatpush.msra.mxu0 0.0
    %298 = vmatpush.msra.mxu0 0.0
    %299 = vmatpush.msra.mxu0 0.0
    %300 = vmatpush.msra.mxu0 0.0
    %301 = vmatpush.msra.mxu0 0.0
    %302 = vmatpush.msra.mxu0 0.0
    %303 = vmatpush.msra.mxu0 0.0
    %304 = vmatpush.msra.mxu0 0.0
    %305 = vmatpush.msra.mxu0 0.0
    %306 = vmatpush.msra.mxu0 %v152
    %307 = vmatpush.msra.mxu0 %v151
    %308 = vmatpush.msra.mxu0 %v150
    %309 = vmatpush.msra.mxu0 %v149
    %310 = vmatmul.f32.gmra.mxu0 %v292
    %v311 = vpop.f32.mrf.mxu0
    %v312 = vadd.f32 %v155, %v311
    %313 = vdwg.mxu0
    %v315 = vrot.slane %v312, 4
    %v317 = vadd.f32 %v144, %v315
    %v318 = vxor.u32 %v317, 2147483648
    %v319 = vmul.f32 %v318, 1.442695
    %v320 = vpow.pop %v319
    %v321 = vadd.f32 %v320, 1.0
    %v322 = vrcp.pop %v321
    %v323 = vmul.f32 %v321, %v322
    %v324 = vsub.f32 1.0, %v323
    %v325 = vmul.f32 %v322, %v324
    %v326 = vadd.f32 %v322, %v325
    %vm327 = vweird.f32 %v321
    %vm328 = vweird.f32 %v322
    %vm329 = vmor %vm327, %vm328
    %v330 = vsel %vm329, %v322, %v326
    %v331 = vand.u32 2147483647, %v321
    %vm332 = vcmp.eq.f32.partialorder %v331, 8.507059e+37
    %v333 = vand.u32 %v321, 2147483648
    %v334 = vor.u32 1.1754944e-38, %v333
    %v335 = vsel %vm332, %v334, %v330
    %v336 = vmul.f32 1.0, %v335
    %337 = vrot.lane.b32.xlu0 %v315, 64
    %v338 = vpop.permute.xlu0 %337
    %v340 = vmul.f32 %v336, %v338
    %342 = vrot.lane.b32.xlu0 %v340, 64
    %v343 = vpop.permute.xlu0 %342
    %v345 = vadd.f32 %v144, %v343
    %v346 = vtanh.pop %v345
    %v347 = vsub.f32 1.0, %v336
    %349 = vrot.lane.b32.xlu0 %v346, 96
    %v350 = vpop.permute.xlu0 %349
    %v352 = vmul.f32 %v347, %v350
    %v353 = vrot.slane %v287, 6
    %v355 = vmul.f32 %v336, %v353
    %v356 = vadd.f32 %v352, %v355
    %v358 = vrot.slane %v356, 4
    %359 = vrot.lane.b32.xlu0 %v358, 96
    %v360 = vpop.permute.xlu0 %359
    %v361 = vsel %vm157, %v360, 0
    %363 = vmatpush.msra.mxu0 0.0
    %364 = vmatpush.msra.mxu0 0.0
    %365 = vmatpush.msra.mxu0 0.0
    %366 = vmatpush.msra.mxu0 0.0
    %367 = vmatpush.msra.mxu0 0.0
    %368 = vmatpush.msra.mxu0 0.0
    %369 = vmatpush.msra.mxu0 0.0
    %370 = vmatpush.msra.mxu0 0.0
    %371 = vmatpush.msra.mxu0 0.0
    %372 = vmatpush.msra.mxu0 0.0
    %373 = vmatpush.msra.mxu0 0.0
    %374 = vmatpush.msra.mxu0 0.0
    %375 = vmatpush.msra.mxu0 %v152
    %376 = vmatpush.msra.mxu0 %v151
    %377 = vmatpush.msra.mxu0 %v150
    %378 = vmatpush.msra.mxu0 %v149
    %379 = vmatmul.f32.gmra.mxu0 %v361
    %v380 = vpop.f32.mrf.mxu0
    %v381 = vadd.f32 %v155, %v380
    %382 = vdwg.mxu0
    %v384 = vrot.slane %v381, 2
    %v386 = vadd.f32 %v144, %v384
    %v387 = vxor.u32 %v386, 2147483648
    %v388 = vmul.f32 %v387, 1.442695
    %v389 = vpow.pop %v388
    %v390 = vadd.f32 %v389, 1.0
    %v391 = vrcp.pop %v390
    %v392 = vmul.f32 %v390, %v391
    %v393 = vsub.f32 1.0, %v392
    %v394 = vmul.f32 %v391, %v393
    %v395 = vadd.f32 %v391, %v394
    %vm396 = vweird.f32 %v390
    %vm397 = vweird.f32 %v391
    %vm398 = vmor %vm396, %vm397
    %v399 = vsel %vm398, %v391, %v395
    %v400 = vand.u32 2147483647, %v390
    %vm401 = vcmp.eq.f32.partialorder %v400, 8.507059e+37
    %v402 = vand.u32 %v390, 2147483648
    %v403 = vor.u32 1.1754944e-38, %v402
    %v404 = vsel %vm401, %v403, %v399
    %v405 = vmul.f32 1.0, %v404
    %406 = vrot.lane.b32.xlu0 %v384, 64
    %v407 = vpop.permute.xlu0 %406
    %v409 = vmul.f32 %v405, %v407
    %411 = vrot.lane.b32.xlu0 %v409, 64
    %v412 = vpop.permute.xlu0 %411
    %v414 = vadd.f32 %v144, %v412
    %v415 = vtanh.pop %v414
    %v416 = vsub.f32 1.0, %v405
    %418 = vrot.lane.b32.xlu0 %v415, 96
    %v419 = vpop.permute.xlu0 %418
    %v421 = vmul.f32 %v416, %v419
    %v422 = vrot.slane %v356, 6
    %v424 = vmul.f32 %v405, %v422
    %v425 = vadd.f32 %v421, %v424
    %v427 = vrot.slane %v425, 6
    %428 = vrot.lane.b32.xlu0 %v427, 96
    %v429 = vpop.permute.xlu0 %428
    %v430 = vsel %vm157, %v429, 0
    %432 = vmatpush.msra.mxu0 0.0
    %433 = vmatpush.msra.mxu0 0.0
    %434 = vmatpush.msra.mxu0 0.0
    %435 = vmatpush.msra.mxu0 0.0
    %436 = vmatpush.msra.mxu0 0.0
    %437 = vmatpush.msra.mxu0 0.0
    %438 = vmatpush.msra.mxu0 0.0
    %439 = vmatpush.msra.mxu0 0.0
    %440 = vmatpush.msra.mxu0 0.0
    %441 = vmatpush.msra.mxu0 0.0
    %442 = vmatpush.msra.mxu0 0.0
    %443 = vmatpush.msra.mxu0 0.0
    %444 = vmatpush.msra.mxu0 %v152
    %445 = vmatpush.msra.mxu0 %v151
    %446 = vmatpush.msra.mxu0 %v150
    %447 = vmatpush.msra.mxu0 %v149
    %448 = vmatmul.f32.gmra.mxu0 %v430
    %v449 = vpop.f32.mrf.mxu0
    %v450 = vadd.f32 %v155, %v449
    %451 = vdwg.mxu0
    %v452 = vadd.f32 %v147, %v450
    %v453 = vxor.u32 %v452, 2147483648
    %v454 = vmul.f32 %v453, 1.442695
    %v455 = vpow.pop %v454
    %v456 = vadd.f32 %v455, 1.0
    %v457 = vrcp.pop %v456
    %v458 = vmul.f32 %v456, %v457
    %v459 = vsub.f32 1.0, %v458
    %v460 = vmul.f32 %v457, %v459
    %v461 = vadd.f32 %v457, %v460
    %vm462 = vweird.f32 %v456
    %vm463 = vweird.f32 %v457
    %vm464 = vmor %vm462, %vm463
    %v465 = vsel %vm464, %v457, %v461
    %v466 = vand.u32 2147483647, %v456
    %vm467 = vcmp.eq.f32.partialorder %v466, 8.507059e+37
    %v468 = vand.u32 %v456, 2147483648
    %v469 = vor.u32 1.1754944e-38, %v468
    %v470 = vsel %vm467, %v469, %v465
    %v471 = vmul.f32 1.0, %v470
    %473 = vrot.lane.b32.xlu0 %v450, 64
    %v474 = vpop.permute.xlu0 %473
    %v476 = vmul.f32 %v471, %v474
    %478 = vrot.lane.b32.xlu0 %v476, 64
    %v479 = vpop.permute.xlu0 %478
    %v481 = vadd.f32 %v147, %v479
    %v482 = vtanh.pop %v481
    %v483 = vsub.f32 1.0, %v471
    %485 = vrot.lane.b32.xlu0 %v482, 96
    %v486 = vpop.permute.xlu0 %485
    %v488 = vmul.f32 %v483, %v486
    %v490 = vmul.f32 %v471, %v427
    %v491 = vadd.f32 %v488, %v490
    %493 = vrot.lane.b32.xlu0 %v491, 96
    %v494 = vpop.permute.xlu0 %493
    %v495 = vsel %vm157, %v494, 0
    %497 = vmatpush.msra.mxu0 0.0
    %498 = vmatpush.msra.mxu0 0.0
    %499 = vmatpush.msra.mxu0 0.0
    %500 = vmatpush.msra.mxu0 0.0
    %501 = vmatpush.msra.mxu0 0.0
    %502 = vmatpush.msra.mxu0 0.0
    %503 = vmatpush.msra.mxu0 0.0
    %504 = vmatpush.msra.mxu0 0.0
    %505 = vmatpush.msra.mxu0 0.0
    %506 = vmatpush.msra.mxu0 0.0
    %507 = vmatpush.msra.mxu0 0.0
    %508 = vmatpush.msra.mxu0 0.0
    %509 = vmatpush.msra.mxu0 %v152
    %510 = vmatpush.msra.mxu0 %v151
    %511 = vmatpush.msra.mxu0 %v150
    %512 = vmatpush.msra.mxu0 %v149
    %513 = vmatmul.f32.gmra.mxu0 %v495
    %v514 = vpop.f32.mrf.mxu0
    %v515 = vadd.f32 %v155, %v514
    %516 = vdwg.mxu0
    %v518 = vrot.slane %v515, 6
    %v520 = vadd.f32 %v147, %v518
    %v521 = vxor.u32 %v520, 2147483648
    %v522 = vmul.f32 %v521, 1.442695
    %v523 = vpow.pop %v522
    %v524 = vadd.f32 %v523, 1.0
    %v525 = vrcp.pop %v524
    %v526 = vmul.f32 %v524, %v525
    %v527 = vsub.f32 1.0, %v526
    %v528 = vmul.f32 %v525, %v527
    %v529 = vadd.f32 %v525, %v528
    %vm530 = vweird.f32 %v524
    %vm531 = vweird.f32 %v525
    %vm532 = vmor %vm530, %vm531
    %v533 = vsel %vm532, %v525, %v529
    %v534 = vand.u32 2147483647, %v524
    %vm535 = vcmp.eq.f32.partialorder %v534, 8.507059e+37
    %v536 = vand.u32 %v524, 2147483648
    %v537 = vor.u32 1.1754944e-38, %v536
    %v538 = vsel %vm535, %v537, %v533
    %v539 = vmul.f32 1.0, %v538
    %540 = vrot.lane.b32.xlu0 %v518, 64
    %v541 = vpop.permute.xlu0 %540
    %v543 = vmul.f32 %v539, %v541
    %545 = vrot.lane.b32.xlu0 %v543, 64
    %v546 = vpop.permute.xlu0 %545
    %v548 = vadd.f32 %v147, %v546
    %v549 = vtanh.pop %v548
    %v550 = vsub.f32 1.0, %v539
    %552 = vrot.lane.b32.xlu0 %v549, 96
    %v553 = vpop.permute.xlu0 %552
    %v555 = vmul.f32 %v550, %v553
    %v556 = vrot.slane %v491, 6
    %v558 = vmul.f32 %v539, %v556
    %v559 = vadd.f32 %v555, %v558
    %v561 = vrot.slane %v559, 2
    %562 = vrot.lane.b32.xlu0 %v561, 96
    %v563 = vpop.permute.xlu0 %562
    %v564 = vsel %vm157, %v563, 0
    %566 = vmatpush.msra.mxu0 0.0
    %567 = vmatpush.msra.mxu0 0.0
    %568 = vmatpush.msra.mxu0 0.0
    %569 = vmatpush.msra.mxu0 0.0
    %570 = vmatpush.msra.mxu0 0.0
    %571 = vmatpush.msra.mxu0 0.0
    %572 = vmatpush.msra.mxu0 0.0
    %573 = vmatpush.msra.mxu0 0.0
    %574 = vmatpush.msra.mxu0 0.0
    %575 = vmatpush.msra.mxu0 0.0
    %576 = vmatpush.msra.mxu0 0.0
    %577 = vmatpush.msra.mxu0 0.0
    %578 = vmatpush.msra.mxu0 %v152
    %579 = vmatpush.msra.mxu0 %v151
    %580 = vmatpush.msra.mxu0 %v150
    %581 = vmatpush.msra.mxu0 %v149
    %582 = vmatmul.f32.gmra.mxu0 %v564
    %v583 = vpop.f32.mrf.mxu0
    %v584 = vadd.f32 %v155, %v583
    %585 = vdwg.mxu0
    %v587 = vrot.slane %v584, 4
    %v589 = vadd.f32 %v147, %v587
    %v590 = vxor.u32 %v589, 2147483648
    %v591 = vmul.f32 %v590, 1.442695
    %v592 = vpow.pop %v591
    %v593 = vadd.f32 %v592, 1.0
    %v594 = vrcp.pop %v593
    %v595 = vmul.f32 %v593, %v594
    %v596 = vsub.f32 1.0, %v595
    %v597 = vmul.f32 %v594, %v596
    %v598 = vadd.f32 %v594, %v597
    %vm599 = vweird.f32 %v593
    %vm600 = vweird.f32 %v594
    %vm601 = vmor %vm599, %vm600
    %v602 = vsel %vm601, %v594, %v598
    %v603 = vand.u32 2147483647, %v593
    %vm604 = vcmp.eq.f32.partialorder %v603, 8.507059e+37
    %v605 = vand.u32 %v593, 2147483648
    %v606 = vor.u32 1.1754944e-38, %v605
    %v607 = vsel %vm604, %v606, %v602
    %v608 = vmul.f32 1.0, %v607
    %609 = vrot.lane.b32.xlu0 %v587, 64
    %v610 = vpop.permute.xlu0 %609
    %v612 = vmul.f32 %v608, %v610
    %614 = vrot.lane.b32.xlu0 %v612, 64
    %v615 = vpop.permute.xlu0 %614
    %v617 = vadd.f32 %v147, %v615
    %v618 = vtanh.pop %v617
    %v619 = vsub.f32 1.0, %v608
    %621 = vrot.lane.b32.xlu0 %v618, 96
    %v622 = vpop.permute.xlu0 %621
    %v624 = vmul.f32 %v619, %v622
    %v625 = vrot.slane %v559, 6
    %v627 = vmul.f32 %v608, %v625
    %v628 = vadd.f32 %v624, %v627
    %v630 = vrot.slane %v628, 4
    %631 = vrot.lane.b32.xlu0 %v630, 96
    %v632 = vpop.permute.xlu0 %631
    %v633 = vsel %vm157, %v632, 0
    %635 = vmatpush.msra.mxu0 0.0
    %636 = vmatpush.msra.mxu0 0.0
    %637 = vmatpush.msra.mxu0 0.0
    %638 = vmatpush.msra.mxu0 0.0
    %639 = vmatpush.msra.mxu0 0.0
    %640 = vmatpush.msra.mxu0 0.0
    %641 = vmatpush.msra.mxu0 0.0
    %642 = vmatpush.msra.mxu0 0.0
    %643 = vmatpush.msra.mxu0 0.0
    %644 = vmatpush.msra.mxu0 0.0
    %645 = vmatpush.msra.mxu0 0.0
    %646 = vmatpush.msra.mxu0 0.0
    %647 = vmatpush.msra.mxu0 %v152
    %648 = vmatpush.msra.mxu0 %v151
    %649 = vmatpush.msra.mxu0 %v150
    %650 = vmatpush.msra.mxu0 %v149
    %651 = vmatmul.f32.gmra.mxu0 %v633
    %v652 = vpop.f32.mrf.mxu0
    %v653 = vadd.f32 %v155, %v652
    %654 = vdwg.mxu0
    %v656 = vrot.slane %v653, 2
    %v658 = vadd.f32 %v147, %v656
    %v659 = vxor.u32 %v658, 2147483648
    %v660 = vmul.f32 %v659, 1.442695
    %v661 = vpow.pop %v660
    %v662 = vadd.f32 %v661, 1.0
    %v663 = vrcp.pop %v662
    %v664 = vmul.f32 %v662, %v663
    %v665 = vsub.f32 1.0, %v664
    %v666 = vmul.f32 %v663, %v665
    %v667 = vadd.f32 %v663, %v666
    %vm668 = vweird.f32 %v662
    %vm669 = vweird.f32 %v663
    %vm670 = vmor %vm668, %vm669
    %v671 = vsel %vm670, %v663, %v667
    %v672 = vand.u32 2147483647, %v662
    %vm673 = vcmp.eq.f32.partialorder %v672, 8.507059e+37
    %v674 = vand.u32 %v662, 2147483648
    %v675 = vor.u32 1.1754944e-38, %v674
    %v676 = vsel %vm673, %v675, %v671
    %v677 = vmul.f32 1.0, %v676
    %678 = vrot.lane.b32.xlu0 %v656, 64
    %v679 = vpop.permute.xlu0 %678
    %v681 = vmul.f32 %v677, %v679
    %683 = vrot.lane.b32.xlu0 %v681, 64
    %v684 = vpop.permute.xlu0 %683
    %v686 = vadd.f32 %v147, %v684
    %v687 = vtanh.pop %v686
    %v688 = vsub.f32 1.0, %v677
    %690 = vrot.lane.b32.xlu0 %v687, 96
    %v691 = vpop.permute.xlu0 %690
    %v693 = vmul.f32 %v688, %v691
    %v694 = vrot.slane %v628, 6
    %v696 = vmul.f32 %v677, %v694
    %v697 = vadd.f32 %v693, %v696
    %v698 = vld [vmem:[%s1] sm:$0xff]
    %v699 = vld [vmem:[%s1 + $0x8] sm:$0xff]
    %v700 = vld [vmem:[%s1 + $0x10] sm:$0xff]
    %v701 = vld [vmem:[%s1 + $0x18] sm:$0xff]
    %v702 = vld [vmem:[%s6] sm:$0xff]
    %v703 = vld [vmem:[%s6 + $0x8] sm:$0xff]
    %v704 = vld [vmem:[%s6 + $0x10] sm:$0xff]
    %v705 = vld [vmem:[%s6 + $0x18] sm:$0xff]
    %v706 = vld [vmem:[%s7] sm:$0x1]
    %v708 = vperm.slane %v706, 0
    %v711 = vsel %vm157, %v698, 0
    %v714 = vsel %vm157, %v699, 0
    %v717 = vsel %vm157, %v700, 0
    %v720 = vsel %vm157, %v701, 0
    %722 = vmatpush.msra.mxu0 0.0
    %723 = vmatpush.msra.mxu0 0.0
    %724 = vmatpush.msra.mxu0 0.0
    %725 = vmatpush.msra.mxu0 0.0
    %726 = vmatpush.msra.mxu0 0.0
    %727 = vmatpush.msra.mxu0 0.0
    %728 = vmatpush.msra.mxu0 0.0
    %729 = vmatpush.msra.mxu0 0.0
    %730 = vmatpush.msra.mxu0 0.0
    %731 = vmatpush.msra.mxu0 0.0
    %732 = vmatpush.msra.mxu0 0.0
    %733 = vmatpush.msra.mxu0 0.0
    %734 = vmatpush.msra.mxu0 %v705
    %735 = vmatpush.msra.mxu0 %v704
    %736 = vmatpush.msra.mxu0 %v703
    %737 = vmatpush.msra.mxu0 %v702
    %738 = vmatmul.f32.gmra.mxu0 %v711
    %v739 = vpop.f32.mrf.mxu0
    %v740 = vadd.f32 %v708, %v739
    %741 = vmatmul.f32.gmra.mxu0 %v714
    %v742 = vpop.f32.mrf.mxu0
    %v743 = vadd.f32 %v708, %v742
    %744 = vmatmul.f32.gmra.mxu0 %v717
    %v745 = vpop.f32.mrf.mxu0
    %v746 = vadd.f32 %v708, %v745
    %747 = vmatmul.f32.gmra.mxu0 %v720
    %v748 = vpop.f32.mrf.mxu0
    %v749 = vadd.f32 %v708, %v748
    %750 = vdwg.mxu0
    %v751 = vmax.f32 %v740, 0.0
    %v752 = vmax.f32 %v743, 0.0
    %v753 = vmax.f32 %v746, 0.0
    %v754 = vmax.f32 %v749, 0.0
    %v755 = vld [vmem:[%s8] sm:$0xff]
    %v756 = vld [vmem:[%s8 + $0x8] sm:$0xff]
    %v757 = vld [vmem:[%s8 + $0x10] sm:$0xff]
    %v758 = vld [vmem:[%s8 + $0x18] sm:$0xff]
    %v759 = vld [vmem:[%s9] sm:$0x1]
    %v761 = vperm.slane %v759, 0
    %v764 = vrot.slane %v697, 6
    %765 = vrot.lane.b32.xlu0 %v764, 96
    %v766 = vpop.permute.xlu0 %765
    %v767 = vsel %vm157, %v766, 0
    %769 = vmatpush.msra.mxu0 0.0
    %770 = vmatpush.msra.mxu0 0.0
    %771 = vmatpush.msra.mxu0 0.0
    %772 = vmatpush.msra.mxu0 0.0
    %773 = vmatpush.msra.mxu0 0.0
    %774 = vmatpush.msra.mxu0 0.0
    %775 = vmatpush.msra.mxu0 0.0
    %776 = vmatpush.msra.mxu0 0.0
    %777 = vmatpush.msra.mxu0 0.0
    %778 = vmatpush.msra.mxu0 0.0
    %779 = vmatpush.msra.mxu0 0.0
    %780 = vmatpush.msra.mxu0 0.0
    %781 = vmatpush.msra.mxu0 %v758
    %782 = vmatpush.msra.mxu0 %v757
    %783 = vmatpush.msra.mxu0 %v756
    %784 = vmatpush.msra.mxu0 %v755
    %785 = vmatmul.f32.gmra.mxu0 %v767
    %v786 = vpop.f32.mrf.mxu0
    %v787 = vadd.f32 %v761, %v786
    %788 = vdwg.mxu0
    %v789 = vmax.f32 %v787, 0.0
    %v791 = vrot.slane %v789, 1
    %v792 = vperm.slane %v789, 0
    %v793 = vperm.slane %v791, 0
    %v796 = vmul.f32 %v751, %v792
    %v797 = vmul.f32 %v752, %v792
    %v798 = vmul.f32 %v753, %v793
    %v799 = vmul.f32 %v754, %v793
    %v800 = vld [vmem:[%s10] sm:$0x1]
    %v802 = vperm.slane %v800, 0
    %v804 = vmul.f32 %v796, %v802
    %v805 = vmul.f32 %v797, %v802
    %v806 = vmul.f32 %v798, %v802
    %v807 = vmul.f32 %v799, %v802
    %v808 = vsel %vm157, %v804, 0.0
    %809 = vadd.xlane.f32.xlu0 %v808
    %v810 = vpop.xlane.xlu0 %809
    %v811 = vsel %vm157, %v805, 0.0
    %812 = vadd.xlane.f32.xlu0 %v811
    %v813 = vpop.xlane.xlu0 %812
    %v814 = vsel %vm157, %v806, 0.0
    %815 = vadd.xlane.f32.xlu0 %v814
    %v816 = vpop.xlane.xlu0 %815
    %v817 = vsel %vm157, %v807, 0.0
    %818 = vadd.xlane.f32.xlu0 %v817
    %v819 = vpop.xlane.xlu0 %818
    %v820 = vld [vmem:[#allocation2] sm:$0x1]
    %v822 = vperm.slane %v820, 0
    %823 = vset.pattern.permute.xlu0 0
    %824 = vperm.xlu0 %823, %v822
    %v825 = vpop.permute.xlu0 %824
    %v827 = vadd.f32 %v810, %v825
    %v828 = vadd.f32 %v813, %v825
    %v829 = vadd.f32 %v816, %v825
    %v830 = vadd.f32 %v819, %v825
    %v835 = vlaneseq
    %v836 = vand.u32 %v835, 127
    %v837 = vperm.slane %v827, %v836
    %v838 = vadd.s32 %v836, 4294967288
    %v839 = vperm.slane %v828, %v838
    %vm840 = vcmask 130112
    %v841 = vsel %vm840, %v839, %v837
    %v842 = vperm.slane %v829, %v836
    %v843 = vperm.slane %v830, %v838
    %v844 = vsel %vm840, %v843, %v842
    %vm845 = vcmask 1041409
    %v846 = vsel %vm845, %v844, %v841
    %vm848 = vcmask 123904
    %v849 = vsel %vm848, %v846, -inf
    %850 = vmax.xlane.f32.xlu0 %v849
    %v851 = vpop.xlane.xlu0 %850
    %v853 = vperm.slane %v851, 0
    %v854 = vperm.slane %v851, 1
    %v857 = vsub.f32 %v827, %v853
    %v858 = vsub.f32 %v828, %v853
    %v859 = vsub.f32 %v829, %v854
    %v860 = vsub.f32 %v830, %v854
    %v861 = vmul.f32 %v857, 1.442695
    %v862 = vpow.pop %v861
    %v863 = vmul.f32 %v858, 1.442695
    %v864 = vpow.pop %v863
    %v865 = vmul.f32 %v859, 1.442695
    %v866 = vpow.pop %v865
    %v867 = vmul.f32 %v860, 1.442695
    %v868 = vpow.pop %v867
    %873 = vset.pattern.permute.xlu0 0
    %874 = vperm.xlu0 %873, %v862
    %v875 = vpop.permute.xlu0 %874
    %876 = vset.pattern.permute.xlu0 0
    %877 = vperm.xlu0 %876, %v864
    %v878 = vpop.permute.xlu0 %877
    %879 = vset.pattern.permute.xlu0 0
    %880 = vperm.xlu0 %879, %v866
    %v881 = vpop.permute.xlu0 %880
    %882 = vset.pattern.permute.xlu0 0
    %883 = vperm.xlu0 %882, %v868
    %v884 = vpop.permute.xlu0 %883
    %v885 = vperm.slane %v875, %v836
    %v886 = vperm.slane %v878, %v838
    %v887 = vsel %vm840, %v886, %v885
    %v888 = vperm.slane %v881, %v836
    %v889 = vperm.slane %v884, %v838
    %v890 = vsel %vm840, %v889, %v888
    %v891 = vsel %vm845, %v890, %v887
    %v893 = vsel %vm848, %v891, 0.0
    %894 = vadd.xlane.f32.xlu0 %v893
    %v895 = vpop.xlane.xlu0 %894
    %v896 = vrcp.pop %v895
    %v898 = vperm.slane %v896, 0
    %v899 = vperm.slane %v896, 1
    %v902 = vmul.f32 %v862, %v898
    %v903 = vmul.f32 %v864, %v898
    %v904 = vmul.f32 %v866, %v899
    %v905 = vmul.f32 %v868, %v899
    %907 = vset.pattern.permute.xlu0 0
    %908 = vperm.xlu0 %907, %v902
    %v909 = vpop.permute.xlu0 %908
    %912 = vset.pattern.permute.xlu0 0
    %913 = vperm.xlu0 %912, %v903
    %v914 = vpop.permute.xlu0 %913
    %917 = vset.pattern.permute.xlu0 0
    %918 = vperm.xlu0 %917, %v904
    %v919 = vpop.permute.xlu0 %918
    %922 = vset.pattern.permute.xlu0 0
    %923 = vperm.xlu0 %922, %v905
    %v924 = vpop.permute.xlu0 %923
    %v926 = vmul.f32 %v909, %v698
    %v927 = vmul.f32 %v914, %v699
    %v928 = vmul.f32 %v919, %v700
    %v929 = vmul.f32 %v924, %v701
    %v930 = vsel %vm157, %v926, 0.0
    %v931 = vsel %vm157, %v927, 0.0
    %v932 = vadd.f32 %v930, %v931
    %v933 = vrot.slane %v932, 4
    %v934 = vadd.f32 %v932, %v933
    %v935 = vrot.slane %v934, 2
    %v936 = vadd.f32 %v934, %v935
    %v937 = vrot.slane %v936, 1
    %v938 = vadd.f32 %v936, %v937
    %v939 = vsel %vm157, %v928, 0.0
    %v940 = vsel %vm157, %v929, 0.0
    %v941 = vadd.f32 %v939, %v940
    %v942 = vrot.slane %v941, 4
    %v943 = vadd.f32 %v941, %v942
    %v944 = vrot.slane %v943, 2
    %v945 = vadd.f32 %v943, %v944
    %v946 = vrot.slane %v945, 1
    %v947 = vadd.f32 %v945, %v946
    %v948 = vld [vmem:[%s12] sm:$0xff]
    %v949 = vld [vmem:[%s12 + $0x8] sm:$0xff]
    %v950 = vld [vmem:[%s12 + $0x10] sm:$0xff]
    %v951 = vld [vmem:[%s12 + $0x18] sm:$0xff]
    %v952 = vld [vmem:[#allocation3] sm:$0x1]
    %v954 = vperm.slane %v952, 0
    %956 = vmatpush.msra.mxu0 0.0
    %957 = vmatpush.msra.mxu0 0.0
    %958 = vmatpush.msra.mxu0 0.0
    %959 = vmatpush.msra.mxu0 0.0
    %960 = vmatpush.msra.mxu0 0.0
    %961 = vmatpush.msra.mxu0 0.0
    %962 = vmatpush.msra.mxu0 0.0
    %963 = vmatpush.msra.mxu0 0.0
    %964 = vmatpush.msra.mxu0 0.0
    %965 = vmatpush.msra.mxu0 0.0
    %966 = vmatpush.msra.mxu0 0.0
    %967 = vmatpush.msra.mxu0 0.0
    %968 = vmatpush.msra.mxu0 %v951
    %969 = vmatpush.msra.mxu0 %v950
    %970 = vmatpush.msra.mxu0 %v949
    %971 = vmatpush.msra.mxu0 %v948
    %972 = vmatmul.f32.gmra.mxu0 %v767
    %v973 = vpop.f32.mrf.mxu0
    %v974 = vadd.f32 %v954, %v973
    %975 = vdwg.mxu0
    %v976 = vmax.f32 %v974, 0.0
    %v977 = vld [vmem:[%s14] sm:$0xff]
    %v978 = vld [vmem:[%s14 + $0x8] sm:$0xff]
    %v979 = vld [vmem:[%s14 + $0x10] sm:$0xff]
    %v980 = vld [vmem:[%s14 + $0x18] sm:$0xff]
    %v981 = vld [vmem:[#allocation6] sm:$0x1]
    %v983 = vperm.slane %v981, 0
    %v987 = vsel %vm845, %v947, %v938
    %v988 = vsel %vm157, %v987, 0
    %990 = vmatpush.msra.mxu0 0.0
    %991 = vmatpush.msra.mxu0 0.0
    %992 = vmatpush.msra.mxu0 0.0
    %993 = vmatpush.msra.mxu0 0.0
    %994 = vmatpush.msra.mxu0 0.0
    %995 = vmatpush.msra.mxu0 0.0
    %996 = vmatpush.msra.mxu0 0.0
    %997 = vmatpush.msra.mxu0 0.0
    %998 = vmatpush.msra.mxu0 0.0
    %999 = vmatpush.msra.mxu0 0.0
    %1000 = vmatpush.msra.mxu0 0.0
    %1001 = vmatpush.msra.mxu0 0.0
    %1002 = vmatpush.msra.mxu0 %v980
    %1003 = vmatpush.msra.mxu0 %v979
    %1004 = vmatpush.msra.mxu0 %v978
    %1005 = vmatpush.msra.mxu0 %v977
    %1006 = vmatmul.f32.gmra.mxu0 %v988
    %v1007 = vpop.f32.mrf.mxu0
    %v1008 = vadd.f32 %v983, %v1007
    %1009 = vdwg.mxu0
    %v1010 = vmax.f32 %v1008, 0.0
    %v1011 = vmul.f32 %v976, %v1010
    %v1012 = vld [vmem:[#allocation8] sm:$0xff]
    %v1013 = vld [vmem:[#allocation8 + $0x8] sm:$0xff]
    %v1014 = vld [vmem:[#allocation8 + $0x10] sm:$0xff]
    %v1015 = vld [vmem:[#allocation8 + $0x18] sm:$0xff]
    %v1016 = vld [vmem:[%s17] sm:$0x1]
    %v1018 = vperm.slane %v1016, 0
    %v1021 = vsel %vm157, %v1011, 0
    %1023 = vmatpush.msra.mxu0 0.0
    %1024 = vmatpush.msra.mxu0 0.0
    %1025 = vmatpush.msra.mxu0 0.0
    %1026 = vmatpush.msra.mxu0 0.0
    %1027 = vmatpush.msra.mxu0 0.0
    %1028 = vmatpush.msra.mxu0 0.0
    %1029 = vmatpush.msra.mxu0 0.0
    %1030 = vmatpush.msra.mxu0 0.0
    %1031 = vmatpush.msra.mxu0 0.0
    %1032 = vmatpush.msra.mxu0 0.0
    %1033 = vmatpush.msra.mxu0 0.0
    %1034 = vmatpush.msra.mxu0 0.0
    %1035 = vmatpush.msra.mxu0 %v1015
    %1036 = vmatpush.msra.mxu0 %v1014
    %1037 = vmatpush.msra.mxu0 %v1013
    %1038 = vmatpush.msra.mxu0 %v1012
    %1039 = vmatmul.f32.gmra.mxu0 %v1021
    %v1040 = vpop.f32.mrf.mxu0
    %v1041 = vadd.f32 %v1018, %v1040
    %1042 = vdwg.mxu0
    %v1043 = vmax.f32 %v1041, 0.0
    %v1044 = vld [vmem:[%s18] sm:$0xff]
    %v1045 = vld [vmem:[%s18 + $0x8] sm:$0xff]
    %v1046 = vld [vmem:[%s18 + $0x10] sm:$0xff]
    %v1047 = vld [vmem:[%s18 + $0x18] sm:$0xff]
    %v1048 = vld [vmem:[%s18 + $0x20] sm:$0xff]
    %v1049 = vld [vmem:[%s18 + $0x28] sm:$0xff]
    %v1050 = vld [vmem:[%s18 + $0x30] sm:$0xff]
    %v1051 = vld [vmem:[%s18 + $0x38] sm:$0xff]
    %v1052 = vld [vmem:[%s19] sm:$0x1]
    %v1054 = vperm.slane %v1052, 0
    %vm1056 = vcmask 523264
    %v1058 = vsel %vm1056, %v1043, 0
    %1060 = vmatpush.msra.mxu0 0.0
    %1061 = vmatpush.msra.mxu0 0.0
    %1062 = vmatpush.msra.mxu0 0.0
    %1063 = vmatpush.msra.mxu0 0.0
    %1064 = vmatpush.msra.mxu0 0.0
    %1065 = vmatpush.msra.mxu0 0.0
    %1066 = vmatpush.msra.mxu0 0.0
    %1067 = vmatpush.msra.mxu0 0.0
    %1068 = vmatpush.msra.mxu0 %v1051
    %1069 = vmatpush.msra.mxu0 %v1050
    %1070 = vmatpush.msra.mxu0 %v1049
    %1071 = vmatpush.msra.mxu0 %v1048
    %1072 = vmatpush.msra.mxu0 %v1047
    %1073 = vmatpush.msra.mxu0 %v1046
    %1074 = vmatpush.msra.mxu0 %v1045
    %1075 = vmatpush.msra.mxu0 %v1044
    %1076 = vmatmul.f32.gmra.mxu0 %v1058
    %v1077 = vpop.f32.mrf.mxu0
    %v1078 = vadd.f32 %v1054, %v1077
    %1079 = vdwg.mxu0
    %1080 = vst [vmem:[#allocation9] sm:$0x3] %v1078
    // Predicated region
    $region94: #{base_model_forward.1} parent=1 // pred_check
      _
    $region95: #{base_model_forward.1} parent=1 // pred_check_branch
      %1082 = sbr.rel (0) target = $region97
    $region96: #{base_model_forward.1} parent=1 // pred_region
      %1084 = vsyncadd [#allocation5], 0
      %s1086 = sshll.u32 [#allocation9], 4
      %s1087 = int_to_ptr.vmem [resolvable:$true] %s1086
      %s1088 = sshll.u32 %s20, 4
      %s1089 = int_to_ptr.hbm [resolvable:$true] %s1088
      %1091 = dma.vmem_to_hbm [thread:$0]  %s1087, 32, %s1089, [#allocation5]
    $region97: #{base_model_forward.1} parent=1 // pred_fallthru
      _
    // Predicated region
    $region98: #{base_model_forward.1} parent=1 // pred_check
      _
    $region99: #{base_model_forward.1} parent=1 // pred_check_branch
      %1093 = sbr.rel (0) target = $region101
    $region100: #{base_model_forward.1} parent=1 // pred_region
      %1095 = dma.done [#allocation5], 32
    $region101: #{base_model_forward.1} parent=1 // pred_fallthru
      _
    %1096 = vsyncpa [#allocation4], 1
    %1097 = vsyncpa [#allocation7], 1
    %1098 = vsyncpa [#allocation5], 1

</llo_original>
